<compile_context>
chip_gen: v7x
topology: tpu7x:2x2x1
jax: 0.10.0
libtpu: 0.0.40
codegen_flags: <defaults>
</compile_context>

<pallas_src>
import functools

import jax
import jax.numpy as jnp
from jax import lax
from jax.experimental import pallas as pl
from jax.experimental.pallas import tpu as pltpu


def _resblock_kernel(x_ref, mask_ref, w1_ref, b1_ref, w2_ref, b2_ref,
                     out_ref, mid_ref, *, Mi, W2, G, C):
    """One batch group, flattened-row formulation.

    x_ref   : (Me, C)    zero-padded frames flattened to rows, plus G halo
                         rows top/bottom (Me = Mi + 2G, Mi = B*(H+2)*W2).
    mask_ref: (Mi, 1)    1.0 at interior pixels, 0.0 at spatial-pad rows.
    w*_ref  : (3, 3C, C) per-dy weight block; rows [dx*C:(dx+1)*C] hold the
                         (Cin, Cout) matrix of tap (dy, dx).  bf16 or f32.
    b*_ref  : (1, C)     f32.
    out_ref : (Mi, C)
    mid_ref : VMEM (Me, C) scratch for the conv1 activation (+ zero halo).
    """
    cdt = w1_ref.dtype                 # matmul operand dtype (bf16 or f32)
    R = Mi + 2 * W2                    # rows needed to cover all dy shifts
    base = G - (W2 + 1)                # row of tap (dy=0, dx=0)

    def taps(src_ref):
        # Hoisted dx-fold: one (R, 3C) staging tensor; the three dy taps are
        # then simple row-slices of it (offsets 0, W2, 2*W2).
        return jnp.concatenate(
            [src_ref[pl.ds(base + dx, R), :].astype(cdt) for dx in range(3)],
            axis=1)

    def conv(stage, w_ref, b_ref):
        acc = jnp.dot(stage[0:Mi], w_ref[0],
                      preferred_element_type=jnp.float32)
        acc += jnp.dot(stage[W2:W2 + Mi], w_ref[1],
                       preferred_element_type=jnp.float32)
        acc += jnp.dot(stage[2 * W2:2 * W2 + Mi], w_ref[2],
                       preferred_element_type=jnp.float32)
        return acc + b_ref[...]

    # ---- conv1 + LeakyReLU(0.2); zero the spatial-pad rows so conv2 sees ----
    # ---- true zero padding (elementwise work stays in f32). -----------------
    c1 = conv(taps(x_ref), w1_ref, b1_ref)
    mid = jnp.where(c1 > 0, c1, 0.2 * c1) * mask_ref[...]

    # ---- stage the activation (with zero halo) in VMEM; G % 16 == 0 so the --
    # ---- big store is sublane-aligned.  Halo re-zeroed each step (tiny, and -
    # ---- safe under megacore sharding of the parallel grid axis). -----------
    mid_ref[pl.ds(0, G), :] = jnp.zeros((G, C), mid_ref.dtype)
    mid_ref[pl.ds(G + Mi, G), :] = jnp.zeros((G, C), mid_ref.dtype)
    mid_ref[pl.ds(G, Mi), :] = mid.astype(mid_ref.dtype)

    # ---- conv2 + residual (residual read is aligned: G % 16 == 0). ----------
    c2 = conv(taps(mid_ref), w2_ref, b2_ref)
    out_ref[...] = (x_ref[pl.ds(G, Mi), :] + c2).astype(out_ref.dtype)


def _conv_weight_to_kfold(w):
    # (Cout, Cin, 3, 3) -> (3, 3*Cin, Cout); within a dy block rows are
    # ordered (dx, cin), matching the tap concatenation order in the kernel.
    cout, cin = w.shape[0], w.shape[1]
    return jnp.transpose(w, (2, 3, 1, 0)).reshape(3, 3 * cin, cout)


def _vmem_capacity_bytes():
    try:
        return int(pltpu.get_tpu_info().vmem_capacity_bytes)
    except Exception:
        return 64 * 2**20            # conservative default (v7x per-TC VMEM)


def _vmem_estimate_bytes(B, Pp, C, G, W2, wbytes):
    Mi = B * Pp
    Me = Mi + 2 * G
    R = Mi + 2 * W2
    xb = 2 * Me * C * 4                    # input block, double-buffered
    mk = 2 * Mi * 128 * 4                  # (Mi,1) mask block, lane-padded
    wb = 2 * 2 * (9 * C * C) * wbytes      # both conv weights, double-buffered
    ob = 2 * Mi * C * 4                    # output block, double-buffered
    sc = Me * C * wbytes                   # mid scratch
    tr = 2 * R * 3 * C * wbytes + 6 * Mi * C * 4   # tap staging + f32 temps
    return xb + mk + wb + ob + sc + tr


def _pick_group_size(N, Pp, C, G, W2, wbytes, budget_bytes):
    # Largest divisor of N under the VMEM budget, keeping Ng = N // B >= 2
    # when possible (2 TCs on v7x + pipeline overlap).
    best = 1
    for b in range(1, N + 1):
        if N % b:
            continue
        if N > 1 and N // b < 2:
            continue
        if _vmem_estimate_bytes(b, Pp, C, G, W2, wbytes) <= budget_bytes:
            best = b
    return best


@functools.partial(jax.jit, static_argnames=("use_bf16",))
def residual_block_nobn(x_nchw, w1, b1, w2, b2, use_bf16=True):
    """x_nchw: (N, C, H, W) f32.  w*: (C, C, 3, 3) PyTorch layout.  b*: (C,)."""
    N, C, H, W = x_nchw.shape
    H2, W2 = H + 2, W + 2

    # Optionally pad the width so the flattened row stride is 8-aligned
    # (only when the extra columns cost <= 25% more rows).
    extra = (-W2) % 8
    if extra * 4 > W2:
        extra = 0
    W2p = W2 + extra
    Pp = H2 * W2p                       # flattened rows per padded image
    G = ((W2p + 1 + 15) // 16) * 16     # 16-aligned halo (>= max tap shift)

    cdt = jnp.bfloat16 if use_bf16 else jnp.float32
    wbytes = 2 if use_bf16 else 4

    cap = _vmem_capacity_bytes()
    budget = (cap * 2) // 5             # ~26 MiB on v7x, ~51 MiB on v5e/v6e
    B = _pick_group_size(N, Pp, C, G, W2p, wbytes, budget)
    Ng = N // B
    Mi = B * Pp
    Me = Mi + 2 * G

    # NCHW -> NHWC, conv zero-pad (+ width-alignment pad), flatten to rows,
    # group the batch, add halo rows.
    x_nhwc = jnp.transpose(x_nchw, (0, 2, 3, 1))
    xp = jnp.pad(x_nhwc, ((0, 0), (1, 1), (1, 1 + extra), (0, 0)))  # (N,H2,W2p,C)
    xf = xp.reshape(Ng, Mi, C)
    xe = jnp.pad(xf, ((0, 0), (G, G), (0, 0)))                      # (Ng,Me,C)

    # Interior-pixel mask over the flattened padded grid (same for all groups).
    q = jnp.arange(Pp, dtype=jnp.int32)
    r, c = q // W2p, q % W2p
    m = ((r >= 1) & (r <= H) & (c >= 1) & (c <= W)).astype(jnp.float32)
    mask = jnp.tile(m, (B,)).reshape(Mi, 1)

    w1m = _conv_weight_to_kfold(w1).astype(cdt)
    w2m = _conv_weight_to_kfold(w2).astype(cdt)
    b1r = b1.reshape(1, C).astype(jnp.float32)
    b2r = b2.reshape(1, C).astype(jnp.float32)

    est = _vmem_estimate_bytes(B, Pp, C, G, W2p, wbytes)
    vmem_limit = int(min(cap * 3 // 4, max(32 * 2**20, 2 * est)))

    kern = functools.partial(_resblock_kernel, Mi=Mi, W2=W2p, G=G, C=C)

    out = pl.pallas_call(
        kern,
        out_shape=jax.ShapeDtypeStruct((Ng, Mi, C), x_nchw.dtype),
        grid_spec=pltpu.PrefetchScalarGridSpec(
            num_scalar_prefetch=0,
            grid=(Ng,),
            in_specs=[
                pl.BlockSpec((None, Me, C), lambda g: (g, 0, 0)),
                pl.BlockSpec((Mi, 1), lambda g: (0, 0)),
                pl.BlockSpec((3, 3 * C, C), lambda g: (0, 0, 0)),
                pl.BlockSpec((1, C), lambda g: (0, 0)),
                pl.BlockSpec((3, 3 * C, C), lambda g: (0, 0, 0)),
                pl.BlockSpec((1, C), lambda g: (0, 0)),
            ],
            out_specs=pl.BlockSpec((None, Mi, C), lambda g: (g, 0, 0)),
            scratch_shapes=[pltpu.VMEM((Me, C), cdt)],
        ),
        compiler_params=pltpu.CompilerParams(
            dimension_semantics=("parallel",),
            vmem_limit_bytes=vmem_limit),
    )(xe, mask, w1m, b1r, w2m, b2r)

    # Crop the spatial (and width-alignment) padding, return to NCHW.
    y = out.reshape(N, H2, W2p, C)[:, 1:H + 1, 1:W + 1, :]
    return jnp.transpose(y, (0, 3, 1, 2))


def _reference(x, w1, b1, w2, b2):
    """Pure-JAX NCHW reference (mirrors the PyTorch forward)."""
    dn = lax.conv_dimension_numbers(x.shape, w1.shape, ("NCHW", "OIHW", "NCHW"))
    c1 = lax.conv_general_dilated(x, w1, (1, 1), ((1, 1), (1, 1)),
                                  dimension_numbers=dn)
    c1 = c1 + b1.reshape(1, -1, 1, 1)
    a1 = jnp.where(c1 > 0, c1, 0.2 * c1)
    c2 = lax.conv_general_dilated(a1, w2, (1, 1), ((1, 1), (1, 1)),
                                  dimension_numbers=dn)
    c2 = c2 + b2.reshape(1, -1, 1, 1)
    return x + c2


def _init_conv_params(key, nf, scale=0.1):
    """Xavier-normal-like init scaled by 0.1 (as in the module); small bias."""
    kw, kb = jax.random.split(key)
    fan = nf * 3 * 3
    std = (2.0 / (fan + fan)) ** 0.5
    w = jax.random.normal(kw, (nf, nf, 3, 3), jnp.float32) * std * scale
    b = jax.random.normal(kb, (nf,), jnp.float32) * 0.01
    return w, b


if __name__ == "__main__":
    nf, N, H, W = 64, 2, 8, 8

    key = jax.random.PRNGKey(0)
    kx, k1, k2 = jax.random.split(key, 3)

    x = jax.random.normal(kx, (N, nf, H, W), jnp.float32)   # NCHW, like PyTorch
    w1, b1 = _init_conv_params(k1, nf)
    w2, b2 = _init_conv_params(k2, nf)

    ref = jax.block_until_ready(_reference(x, w1, b1, w2, b2))

    # Exact-precision path (f32 MXU operands): tight parity with the module.
    out_f32 = jax.block_until_ready(
        residual_block_nobn(x, w1, b1, w2, b2, use_bf16=False))
    assert out_f32.shape == (N, nf, H, W)
    assert jnp.allclose(out_f32, ref, atol=1e-4, rtol=1e-4), "f32 path mismatch"

    # Fast path (bf16 operands, f32 accumulation): ~2-3x MXU throughput.
    out_bf16 = jax.block_until_ready(
        residual_block_nobn(x, w1, b1, w2, b2, use_bf16=True))
    assert out_bf16.shape == (N, nf, H, W)
    assert jnp.allclose(out_bf16, ref, atol=2e-3, rtol=2e-3), "bf16 path mismatch"

    print("KERNEL_OK")
</pallas_src>

<mosaic_0001>
module attributes {stable_mosaic.version = 11 : i64} {
  func.func @_resblock_kernel(%arg0: i32, %arg1: memref<1x132x64xf32, #tpu.memory_space<vmem>>, %arg2: memref<100x1xf32, #tpu.memory_space<vmem>>, %arg3: memref<3x192x64xf32, #tpu.memory_space<vmem>>, %arg4: memref<1x64xf32, #tpu.memory_space<vmem>>, %arg5: memref<3x192x64xf32, #tpu.memory_space<vmem>>, %arg6: memref<1x64xf32, #tpu.memory_space<vmem>>, %arg7: memref<1x100x64xf32, #tpu.memory_space<vmem>>, %arg8: memref<132x64xf32, #tpu.memory_space<vmem>>) attributes {dimension_semantics = [#tpu.dimension_semantics<parallel>], iteration_bounds = array<i64: 2>, scalar_prefetch = 0 : i64, scratch_operands = 1 : i64, tpu.core_type = #tpu.core_type<tc>, window_params = [{transform_indices = @transform_0, window_bounds = array<i64: 1, 132, 64>}, {pipeline_mode = #tpu.pipeline_mode<synchronous>, transform_indices = @transform_1, window_bounds = array<i64: 100, 1>}, {pipeline_mode = #tpu.pipeline_mode<synchronous>, transform_indices = @transform_2, window_bounds = array<i64: 3, 192, 64>}, {pipeline_mode = #tpu.pipeline_mode<synchronous>, transform_indices = @transform_3, window_bounds = array<i64: 1, 64>}, {pipeline_mode = #tpu.pipeline_mode<synchronous>, transform_indices = @transform_4, window_bounds = array<i64: 3, 192, 64>}, {pipeline_mode = #tpu.pipeline_mode<synchronous>, transform_indices = @transform_5, window_bounds = array<i64: 1, 64>}, {transform_indices = @transform_6, window_bounds = array<i64: 1, 100, 64>}]} {
    %c0 = arith.constant 0 : index
    %c5 = arith.constant 5 : index
    %c0_0 = arith.constant 0 : index
    %0 = vector.load %arg1[%c0, %c5, %c0_0] : memref<1x132x64xf32, #tpu.memory_space<vmem>>, vector<1x120x64xf32>
    %1 = vector.shape_cast %0 : vector<1x120x64xf32> to vector<120x64xf32>
    %c0_1 = arith.constant 0 : index
    %c6 = arith.constant 6 : index
    %c0_2 = arith.constant 0 : index
    %2 = vector.load %arg1[%c0_1, %c6, %c0_2] : memref<1x132x64xf32, #tpu.memory_space<vmem>>, vector<1x120x64xf32>
    %3 = vector.shape_cast %2 : vector<1x120x64xf32> to vector<120x64xf32>
    %c0_3 = arith.constant 0 : index
    %c7 = arith.constant 7 : index
    %c0_4 = arith.constant 0 : index
    %4 = vector.load %arg1[%c0_3, %c7, %c0_4] : memref<1x132x64xf32, #tpu.memory_space<vmem>>, vector<1x120x64xf32>
    %5 = vector.shape_cast %4 : vector<1x120x64xf32> to vector<120x64xf32>
    %6 = tpu.concatenate %1, %3, %5 in 1 : vector<120x64xf32>, vector<120x64xf32>, vector<120x64xf32> -> vector<120x192xf32>
    %7 = vector.extract_strided_slice %6 {offsets = [0, 0], sizes = [100, 192], strides = [1, 1]} : vector<120x192xf32> to vector<100x192xf32>
    %c0_5 = arith.constant 0 : index
    %c0_6 = arith.constant 0 : index
    %c0_7 = arith.constant 0 : index
    %8 = vector.load %arg3[%c0_5, %c0_6, %c0_7] : memref<3x192x64xf32, #tpu.memory_space<vmem>>, vector<1x192x64xf32>
    %9 = vector.shape_cast %8 : vector<1x192x64xf32> to vector<192x64xf32>
    %cst = arith.constant dense<0.000000e+00> : vector<100x64xf32>
    %10 = tpu.matmul %7, %9, %cst {dimension_numbers = #tpu.dot_dimension_numbers<[1], [0], [0], [1], [0, 0, 1, 1], [], []>} : vector<100x192xf32>, vector<192x64xf32>, vector<100x64xf32> -> vector<100x64xf32>
    %11 = vector.extract_strided_slice %6 {offsets = [10, 0], sizes = [100, 192], strides = [1, 1]} : vector<120x192xf32> to vector<100x192xf32>
    %c1 = arith.constant 1 : index
    %c0_8 = arith.constant 0 : index
    %c0_9 = arith.constant 0 : index
    %12 = vector.load %arg3[%c1, %c0_8, %c0_9] : memref<3x192x64xf32, #tpu.memory_space<vmem>>, vector<1x192x64xf32>
    %13 = vector.shape_cast %12 : vector<1x192x64xf32> to vector<192x64xf32>
    %cst_10 = arith.constant dense<0.000000e+00> : vector<100x64xf32>
    %14 = tpu.matmul %11, %13, %cst_10 {dimension_numbers = #tpu.dot_dimension_numbers<[1], [0], [0], [1], [0, 0, 1, 1], [], []>} : vector<100x192xf32>, vector<192x64xf32>, vector<100x64xf32> -> vector<100x64xf32>
    %15 = arith.addf %10, %14 : vector<100x64xf32>
    %16 = vector.extract_strided_slice %6 {offsets = [20, 0], sizes = [100, 192], strides = [1, 1]} : vector<120x192xf32> to vector<100x192xf32>
    %c2 = arith.constant 2 : index
    %c0_11 = arith.constant 0 : index
    %c0_12 = arith.constant 0 : index
    %17 = vector.load %arg3[%c2, %c0_11, %c0_12] : memref<3x192x64xf32, #tpu.memory_space<vmem>>, vector<1x192x64xf32>
    %18 = vector.shape_cast %17 : vector<1x192x64xf32> to vector<192x64xf32>
    %cst_13 = arith.constant dense<0.000000e+00> : vector<100x64xf32>
    %19 = tpu.matmul %16, %18, %cst_13 {dimension_numbers = #tpu.dot_dimension_numbers<[1], [0], [0], [1], [0, 0, 1, 1], [], []>} : vector<100x192xf32>, vector<192x64xf32>, vector<100x64xf32> -> vector<100x64xf32>
    %20 = arith.addf %15, %19 : vector<100x64xf32>
    %c0_14 = arith.constant 0 : index
    %c0_15 = arith.constant 0 : index
    %21 = vector.load %arg4[%c0_14, %c0_15] : memref<1x64xf32, #tpu.memory_space<vmem>>, vector<1x64xf32>
    %22 = vector.broadcast %21 : vector<1x64xf32> to vector<100x64xf32>
    %23 = arith.addf %20, %22 : vector<100x64xf32>
    %cst_16 = arith.constant 0.000000e+00 : f32
    %24 = vector.broadcast %cst_16 : f32 to vector<100x64xf32>
    %25 = arith.cmpf ogt, %23, %24 : vector<100x64xf32>
    %cst_17 = arith.constant 2.000000e-01 : f32
    %26 = vector.broadcast %cst_17 : f32 to vector<100x64xf32>
    %27 = arith.mulf %26, %23 : vector<100x64xf32>
    %28 = arith.select %25, %23, %27 : vector<100x64xi1>, vector<100x64xf32>
    %c0_18 = arith.constant 0 : index
    %c0_19 = arith.constant 0 : index
    %29 = vector.load %arg2[%c0_18, %c0_19] : memref<100x1xf32, #tpu.memory_space<vmem>>, vector<100x1xf32>
    %30 = vector.broadcast %29 : vector<100x1xf32> to vector<100x64xf32>
    %31 = arith.mulf %28, %30 : vector<100x64xf32>
    %cst_20 = arith.constant 0.000000e+00 : f32
    %32 = vector.broadcast %cst_20 : f32 to vector<16x64xf32>
    %c0_21 = arith.constant 0 : index
    %c0_22 = arith.constant 0 : index
    %33 = vector.load %arg8[%c0_21, %c0_22] : memref<132x64xf32, #tpu.memory_space<vmem>>, vector<16x64xf32>
    tpu.vector_store %arg8[%c0_21, %c0_22], %32 {strides = array<i32>} : memref<132x64xf32, #tpu.memory_space<vmem>>, vector<16x64xf32>,
    %cst_23 = arith.constant 0.000000e+00 : f32
    %34 = vector.broadcast %cst_23 : f32 to vector<16x64xf32>
    %c116 = arith.constant 116 : index
    %c0_24 = arith.constant 0 : index
    %35 = vector.load %arg8[%c116, %c0_24] : memref<132x64xf32, #tpu.memory_space<vmem>>, vector<16x64xf32>
    tpu.vector_store %arg8[%c116, %c0_24], %34 {strides = array<i32>} : memref<132x64xf32, #tpu.memory_space<vmem>>, vector<16x64xf32>,
    %c16 = arith.constant 16 : index
    %c0_25 = arith.constant 0 : index
    %36 = vector.load %arg8[%c16, %c0_25] : memref<132x64xf32, #tpu.memory_space<vmem>>, vector<100x64xf32>
    tpu.vector_store %arg8[%c16, %c0_25], %31 {strides = array<i32>} : memref<132x64xf32, #tpu.memory_space<vmem>>, vector<100x64xf32>,
    %c5_26 = arith.constant 5 : index
    %c0_27 = arith.constant 0 : index
    %37 = vector.load %arg8[%c5_26, %c0_27] : memref<132x64xf32, #tpu.memory_space<vmem>>, vector<120x64xf32>
    %c6_28 = arith.constant 6 : index
    %c0_29 = arith.constant 0 : index
    %38 = vector.load %arg8[%c6_28, %c0_29] : memref<132x64xf32, #tpu.memory_space<vmem>>, vector<120x64xf32>
    %c7_30 = arith.constant 7 : index
    %c0_31 = arith.constant 0 : index
    %39 = vector.load %arg8[%c7_30, %c0_31] : memref<132x64xf32, #tpu.memory_space<vmem>>, vector<120x64xf32>
    %40 = tpu.concatenate %37, %38, %39 in 1 : vector<120x64xf32>, vector<120x64xf32>, vector<120x64xf32> -> vector<120x192xf32>
    %41 = vector.extract_strided_slice %40 {offsets = [0, 0], sizes = [100, 192], strides = [1, 1]} : vector<120x192xf32> to vector<100x192xf32>
    %c0_32 = arith.constant 0 : index
    %c0_33 = arith.constant 0 : index
    %c0_34 = arith.constant 0 : index
    %42 = vector.load %arg5[%c0_32, %c0_33, %c0_34] : memref<3x192x64xf32, #tpu.memory_space<vmem>>, vector<1x192x64xf32>
    %43 = vector.shape_cast %42 : vector<1x192x64xf32> to vector<192x64xf32>
    %cst_35 = arith.constant dense<0.000000e+00> : vector<100x64xf32>
    %44 = tpu.matmul %41, %43, %cst_35 {dimension_numbers = #tpu.dot_dimension_numbers<[1], [0], [0], [1], [0, 0, 1, 1], [], []>} : vector<100x192xf32>, vector<192x64xf32>, vector<100x64xf32> -> vector<100x64xf32>
    %45 = vector.extract_strided_slice %40 {offsets = [10, 0], sizes = [100, 192], strides = [1, 1]} : vector<120x192xf32> to vector<100x192xf32>
    %c1_36 = arith.constant 1 : index
    %c0_37 = arith.constant 0 : index
    %c0_38 = arith.constant 0 : index
    %46 = vector.load %arg5[%c1_36, %c0_37, %c0_38] : memref<3x192x64xf32, #tpu.memory_space<vmem>>, vector<1x192x64xf32>
    %47 = vector.shape_cast %46 : vector<1x192x64xf32> to vector<192x64xf32>
    %cst_39 = arith.constant dense<0.000000e+00> : vector<100x64xf32>
    %48 = tpu.matmul %45, %47, %cst_39 {dimension_numbers = #tpu.dot_dimension_numbers<[1], [0], [0], [1], [0, 0, 1, 1], [], []>} : vector<100x192xf32>, vector<192x64xf32>, vector<100x64xf32> -> vector<100x64xf32>
    %49 = arith.addf %44, %48 : vector<100x64xf32>
    %50 = vector.extract_strided_slice %40 {offsets = [20, 0], sizes = [100, 192], strides = [1, 1]} : vector<120x192xf32> to vector<100x192xf32>
    %c2_40 = arith.constant 2 : index
    %c0_41 = arith.constant 0 : index
    %c0_42 = arith.constant 0 : index
    %51 = vector.load %arg5[%c2_40, %c0_41, %c0_42] : memref<3x192x64xf32, #tpu.memory_space<vmem>>, vector<1x192x64xf32>
    %52 = vector.shape_cast %51 : vector<1x192x64xf32> to vector<192x64xf32>
    %cst_43 = arith.constant dense<0.000000e+00> : vector<100x64xf32>
    %53 = tpu.matmul %50, %52, %cst_43 {dimension_numbers = #tpu.dot_dimension_numbers<[1], [0], [0], [1], [0, 0, 1, 1], [], []>} : vector<100x192xf32>, vector<192x64xf32>, vector<100x64xf32> -> vector<100x64xf32>
    %54 = arith.addf %49, %53 : vector<100x64xf32>
    %c0_44 = arith.constant 0 : index
    %c0_45 = arith.constant 0 : index
    %55 = vector.load %arg6[%c0_44, %c0_45] : memref<1x64xf32, #tpu.memory_space<vmem>>, vector<1x64xf32>
    %56 = vector.broadcast %55 : vector<1x64xf32> to vector<100x64xf32>
    %57 = arith.addf %54, %56 : vector<100x64xf32>
    %c0_46 = arith.constant 0 : index
    %c16_47 = arith.constant 16 : index
    %c0_48 = arith.constant 0 : index
    %58 = vector.load %arg1[%c0_46, %c16_47, %c0_48] : memref<1x132x64xf32, #tpu.memory_space<vmem>>, vector<1x100x64xf32>
    %59 = vector.shape_cast %58 : vector<1x100x64xf32> to vector<100x64xf32>
    %60 = arith.addf %59, %57 : vector<100x64xf32>
    %c0_49 = arith.constant 0 : index
    %c0_50 = arith.constant 0 : index
    %c0_51 = arith.constant 0 : index
    %61 = vector.load %arg7[%c0_49, %c0_50, %c0_51] : memref<1x100x64xf32, #tpu.memory_space<vmem>>, vector<1x100x64xf32>
    %62 = vector.shape_cast %61 : vector<1x100x64xf32> to vector<100x64xf32>
    %63 = vector.shape_cast %60 : vector<100x64xf32> to vector<1x100x64xf32>
    tpu.vector_store %arg7[%c0_49, %c0_50, %c0_51], %63 {strides = array<i32>} : memref<1x100x64xf32, #tpu.memory_space<vmem>>, vector<1x100x64xf32>,
    return
  }
  func.func @transform_0(%arg0: i32) -> (i32, i32, i32) {
    %c0_i32 = arith.constant 0 : i32
    %c0_i32_0 = arith.constant 0 : i32
    %c0_i32_1 = arith.constant 0 : i32
    return %arg0, %c0_i32, %c0_i32_0 : i32, i32, i32
  }
  func.func @transform_1(%arg0: i32) -> (i32, i32) {
    %c0_i32 = arith.constant 0 : i32
    %c0_i32_0 = arith.constant 0 : i32
    %c0_i32_1 = arith.constant 0 : i32
    return %c0_i32, %c0_i32_0 : i32, i32
  }
  func.func @transform_2(%arg0: i32) -> (i32, i32, i32) {
    %c0_i32 = arith.constant 0 : i32
    %c0_i32_0 = arith.constant 0 : i32
    %c0_i32_1 = arith.constant 0 : i32
    %c0_i32_2 = arith.constant 0 : i32
    return %c0_i32, %c0_i32_0, %c0_i32_1 : i32, i32, i32
  }
  func.func @transform_3(%arg0: i32) -> (i32, i32) {
    %c0_i32 = arith.constant 0 : i32
    %c0_i32_0 = arith.constant 0 : i32
    %c0_i32_1 = arith.constant 0 : i32
    return %c0_i32, %c0_i32_0 : i32, i32
  }
  func.func @transform_4(%arg0: i32) -> (i32, i32, i32) {
    %c0_i32 = arith.constant 0 : i32
    %c0_i32_0 = arith.constant 0 : i32
    %c0_i32_1 = arith.constant 0 : i32
    %c0_i32_2 = arith.constant 0 : i32
    return %c0_i32, %c0_i32_0, %c0_i32_1 : i32, i32, i32
  }
  func.func @transform_5(%arg0: i32) -> (i32, i32) {
    %c0_i32 = arith.constant 0 : i32
    %c0_i32_0 = arith.constant 0 : i32
    %c0_i32_1 = arith.constant 0 : i32
    return %c0_i32, %c0_i32_0 : i32, i32
  }
  func.func @transform_6(%arg0: i32) -> (i32, i32, i32) {
    %c0_i32 = arith.constant 0 : i32
    %c0_i32_0 = arith.constant 0 : i32
    %c0_i32_1 = arith.constant 0 : i32
    return %arg0, %c0_i32, %c0_i32_0 : i32, i32, i32
  }
}

</mosaic_0001>

<llo_original>
// kernel: residual_block_nobn.1
$region0: #{residual_block_nobn.1}
  #allocation0 [shape = 'u32[]', space=smem, size = 0x4, offset = 0x4, fixed_abs, tag = 'smem constant byte address 0x4 - core index']
  #allocation1 [shape = 'u32[144,128]{1,0:T(1,128)}', space=vmem, size = 0x12000, scoped, tag = 'internal scratch']
  #allocation2 [shape = 'f32[132,64]{1,0:T(8,128)}', space=vmem, size = 0x11000, scoped, tag = 'scratch operand']
  %s0 = inlined_call_operand.vmem [shape: f32[2,132,64], index: 0, kind: input, shape index: {}]
  %s1 = inlined_call_operand.vmem [shape: f32[100,1], index: 1, kind: input, shape index: {}]
  %s2 = inlined_call_operand.vmem [shape: f32[3,192,64], index: 2, kind: input, shape index: {}]
  %s3 = inlined_call_operand.vmem [shape: f32[1,64], index: 3, kind: input, shape index: {}]
  %s4 = inlined_call_operand.vmem [shape: f32[3,192,64], index: 4, kind: input, shape index: {}]
  %s5 = inlined_call_operand.vmem [shape: f32[1,64], index: 5, kind: input, shape index: {}]
  %s6 = inlined_call_operand.vmem [shape: f32[2,100,64], index: 6, kind: output, shape index: {}]
  %s7 = sld [smem:[#allocation0]]
  $region57: #{residual_block_nobn.1} parent=0
    _
  %s9 = ssub.s32 1, %s7
  %s10 = scalar_select 0, %s9, %s7
  loop: start=0, step=1, limit=4
  $region2: #{residual_block_nobn.1} parent=0 // loop_pre_header
    _
  $region3: #{residual_block_nobn.1} parent=0 // loop_header
    %s12 = sphi 0, %s16
    %p13 = scmp.ge.s32.totalorder %s12, 4
    %s22 = sphi 0, %s24
    %s25 = sphi 0, %s22
    %s26 = sphi 0, %s25
    %s42 = sphi 0, %s26
    %s46 = sphi 0, %s46
    %s48 = sphi 0, %s46
    %s49 = sphi 0, %s48
    %s63 = sphi 0, %s49
    %s67 = sphi 0, %s67
    %s69 = sphi 0, %s67
    %s70 = sphi 0, %s69
    %s84 = sphi 0, %s70
    %s88 = sphi 0, %s88
    %s90 = sphi 0, %s88
    %s91 = sphi 0, %s90
    %s105 = sphi 0, %s91
    %s109 = sphi 0, %s109
    %s111 = sphi 0, %s109
    %s112 = sphi 0, %s111
    %s126 = sphi 0, %s112
    %s130 = sphi 0, %s130
    %s132 = sphi 0, %s130
    %s133 = sphi 0, %s132
    %s147 = sphi 0, %s133
    %s153 = sphi 0, %s155
    %s156 = sphi 0, %s153
    %s157 = sphi 0, %s156
    %s173 = sphi 0, %s157
  $region4: #{residual_block_nobn.1} parent=0 // loop_header_branch
    %15 = sbr.rel (%p13) target = $region8
  $region5: #{residual_block_nobn.1} parent=0 // loop_body
    %s17 = ssub.s32 %s12, 1
    %s18 = ssub.s32 %s12, 2
    %s19 = sadd.s32 %s12, 1
    %s20 = ssub.s32 %s12, %s19
    %p21 = scmp.eq.s32.totalorder %s20, 0
    %s23 = sadd.s32 %s22, 1
    %s24 = scalar_select %p21, %s22, %s23
    %p27 = pneg %p21
    %p28 = scmp.eq.s32.totalorder %s12, 1
    %p29 = por %p27, %p28
    %p30 = scmp.ne.s32.totalorder %s22, %s25
    %p31 = scmp.eq.s32.totalorder %s12, 0
    %p32 = por %p30, %p31
    %p33 = scmp.ne.s32.totalorder %s22, %s25
    %p34 = scmp.eq.s32.totalorder %s17, 1
    %p35 = por %p33, %p34
    %p36 = scmp.ne.s32.totalorder %s25, %s26
    %p37 = scmp.eq.s32.totalorder %s17, 0
    %p38 = por %p36, %p37
    %p39 = scmp.ne.s32.totalorder %s25, %s26
    %p40 = scmp.eq.s32.totalorder %s18, 1
    %p41 = por %p39, %p40
    %p43 = scmp.ne.s32.totalorder %s26, %s42
    %p44 = scmp.eq.s32.totalorder %s18, 0
    %p45 = por %p43, %p44
    %s47 = sadd.s32 %s46, 1
    %p50 = scmp.eq.s32.totalorder %s12, 1
    %p51 = scmp.ne.s32.totalorder %s46, %s48
    %p52 = scmp.eq.s32.totalorder %s12, 0
    %p53 = por %p51, %p52
    %p54 = scmp.ne.s32.totalorder %s46, %s48
    %p55 = scmp.eq.s32.totalorder %s17, 1
    %p56 = por %p54, %p55
    %p57 = scmp.ne.s32.totalorder %s48, %s49
    %p58 = scmp.eq.s32.totalorder %s17, 0
    %p59 = por %p57, %p58
    %p60 = scmp.ne.s32.totalorder %s48, %s49
    %p61 = scmp.eq.s32.totalorder %s18, 1
    %p62 = por %p60, %p61
    %p64 = scmp.ne.s32.totalorder %s49, %s63
    %p65 = scmp.eq.s32.totalorder %s18, 0
    %p66 = por %p64, %p65
    %s68 = sadd.s32 %s67, 1
    %p71 = scmp.eq.s32.totalorder %s12, 1
    %p72 = scmp.ne.s32.totalorder %s67, %s69
    %p73 = scmp.eq.s32.totalorder %s12, 0
    %p74 = por %p72, %p73
    %p75 = scmp.ne.s32.totalorder %s67, %s69
    %p76 = scmp.eq.s32.totalorder %s17, 1
    %p77 = por %p75, %p76
    %p78 = scmp.ne.s32.totalorder %s69, %s70
    %p79 = scmp.eq.s32.totalorder %s17, 0
    %p80 = por %p78, %p79
    %p81 = scmp.ne.s32.totalorder %s69, %s70
    %p82 = scmp.eq.s32.totalorder %s18, 1
    %p83 = por %p81, %p82
    %p85 = scmp.ne.s32.totalorder %s70, %s84
    %p86 = scmp.eq.s32.totalorder %s18, 0
    %p87 = por %p85, %p86
    %s89 = sadd.s32 %s88, 1
    %p92 = scmp.eq.s32.totalorder %s12, 1
    %p93 = scmp.ne.s32.totalorder %s88, %s90
    %p94 = scmp.eq.s32.totalorder %s12, 0
    %p95 = por %p93, %p94
    %p96 = scmp.ne.s32.totalorder %s88, %s90
    %p97 = scmp.eq.s32.totalorder %s17, 1
    %p98 = por %p96, %p97
    %p99 = scmp.ne.s32.totalorder %s90, %s91
    %p100 = scmp.eq.s32.totalorder %s17, 0
    %p101 = por %p99, %p100
    %p102 = scmp.ne.s32.totalorder %s90, %s91
    %p103 = scmp.eq.s32.totalorder %s18, 1
    %p104 = por %p102, %p103
    %p106 = scmp.ne.s32.totalorder %s91, %s105
    %p107 = scmp.eq.s32.totalorder %s18, 0
    %p108 = por %p106, %p107
    %s110 = sadd.s32 %s109, 1
    %p113 = scmp.eq.s32.totalorder %s12, 1
    %p114 = scmp.ne.s32.totalorder %s109, %s111
    %p115 = scmp.eq.s32.totalorder %s12, 0
    %p116 = por %p114, %p115
    %p117 = scmp.ne.s32.totalorder %s109, %s111
    %p118 = scmp.eq.s32.totalorder %s17, 1
    %p119 = por %p117, %p118
    %p120 = scmp.ne.s32.totalorder %s111, %s112
    %p121 = scmp.eq.s32.totalorder %s17, 0
    %p122 = por %p120, %p121
    %p123 = scmp.ne.s32.totalorder %s111, %s112
    %p124 = scmp.eq.s32.totalorder %s18, 1
    %p125 = por %p123, %p124
    %p127 = scmp.ne.s32.totalorder %s112, %s126
    %p128 = scmp.eq.s32.totalorder %s18, 0
    %p129 = por %p127, %p128
    %s131 = sadd.s32 %s130, 1
    %p134 = scmp.eq.s32.totalorder %s12, 1
    %p135 = scmp.ne.s32.totalorder %s130, %s132
    %p136 = scmp.eq.s32.totalorder %s12, 0
    %p137 = por %p135, %p136
    %p138 = scmp.ne.s32.totalorder %s130, %s132
    %p139 = scmp.eq.s32.totalorder %s17, 1
    %p140 = por %p138, %p139
    %p141 = scmp.ne.s32.totalorder %s132, %s133
    %p142 = scmp.eq.s32.totalorder %s17, 0
    %p143 = por %p141, %p142
    %p144 = scmp.ne.s32.totalorder %s132, %s133
    %p145 = scmp.eq.s32.totalorder %s18, 1
    %p146 = por %p144, %p145
    %p148 = scmp.ne.s32.totalorder %s133, %s147
    %p149 = scmp.eq.s32.totalorder %s18, 0
    %p150 = por %p148, %p149
    %s151 = ssub.s32 %s12, %s19
    %p152 = scmp.eq.s32.totalorder %s151, 0
    %s154 = sadd.s32 %s153, 1
    %s155 = scalar_select %p152, %s153, %s154
    %p158 = pneg %p152
    %p159 = scmp.eq.s32.totalorder %s12, 1
    %p160 = por %p158, %p159
    %p161 = scmp.ne.s32.totalorder %s153, %s156
    %p162 = scmp.eq.s32.totalorder %s12, 0
    %p163 = por %p161, %p162
    %p164 = scmp.ne.s32.totalorder %s153, %s156
    %p165 = scmp.eq.s32.totalorder %s17, 1
    %p166 = por %p164, %p165
    %p167 = scmp.ne.s32.totalorder %s156, %s157
    %p168 = scmp.eq.s32.totalorder %s17, 0
    %p169 = por %p167, %p168
    %p170 = scmp.ne.s32.totalorder %s156, %s157
    %p171 = scmp.eq.s32.totalorder %s18, 1
    %p172 = por %p170, %p171
    %p174 = scmp.ne.s32.totalorder %s157, %s173
    %p175 = scmp.eq.s32.totalorder %s18, 0
    %p176 = por %p174, %p175
    %p177 = scmp.le.s32.totalorder 1, %s12
    %p178 = scmp.lt.s32.totalorder %s12, 3
    %p179 = pnand %p177, %p178
    %p180 = pneg %p179
    // Predicated region
    $region9: #{residual_block_nobn.1} parent=5 // pred_check
      _
    $region10: #{residual_block_nobn.1} parent=5 // pred_check_branch
      %182 = sbr.rel (%p179) target = $region12
    $region11: #{residual_block_nobn.1} parent=5 // pred_region
      %s183 = ssub.s32 %s12, 1
      // Predicated region
      $region13: #{residual_block_nobn.1} parent=11 // pred_check
        %p184 = pneg %p59
      $region14: #{residual_block_nobn.1} parent=11 // pred_check_branch
        %186 = sbr.rel (%p184) target = $region16
      $region15: #{residual_block_nobn.1} parent=11 // pred_region
        _
      $region16: #{residual_block_nobn.1} parent=11 // pred_fallthru
        _
      // Predicated region
      $region17: #{residual_block_nobn.1} parent=11 // pred_check
        %p187 = pneg %p80
      $region18: #{residual_block_nobn.1} parent=11 // pred_check_branch
        %189 = sbr.rel (%p187) target = $region20
      $region19: #{residual_block_nobn.1} parent=11 // pred_region
        _
      $region20: #{residual_block_nobn.1} parent=11 // pred_fallthru
        _
      // Predicated region
      $region21: #{residual_block_nobn.1} parent=11 // pred_check
        %p190 = pneg %p101
      $region22: #{residual_block_nobn.1} parent=11 // pred_check_branch
        %192 = sbr.rel (%p190) target = $region24
      $region23: #{residual_block_nobn.1} parent=11 // pred_region
        _
      $region24: #{residual_block_nobn.1} parent=11 // pred_fallthru
        _
      // Predicated region
      $region25: #{residual_block_nobn.1} parent=11 // pred_check
        %p193 = pneg %p122
      $region26: #{residual_block_nobn.1} parent=11 // pred_check_branch
        %195 = sbr.rel (%p193) target = $region28
      $region27: #{residual_block_nobn.1} parent=11 // pred_region
        _
      $region28: #{residual_block_nobn.1} parent=11 // pred_fallthru
        _
      // Predicated region
      $region29: #{residual_block_nobn.1} parent=11 // pred_check
        %p196 = pneg %p143
      $region30: #{residual_block_nobn.1} parent=11 // pred_check_branch
        %198 = sbr.rel (%p196) target = $region32
      $region31: #{residual_block_nobn.1} parent=11 // pred_region
        _
      $region32: #{residual_block_nobn.1} parent=11 // pred_fallthru
        _
    $region12: #{residual_block_nobn.1} parent=5 // pred_fallthru
      _
    %p199 = scmp.lt.s32.totalorder %s12, 2
    // Predicated region
    $region33: #{residual_block_nobn.1} parent=5 // pred_check
      %p200 = pneg %p199
    $region34: #{residual_block_nobn.1} parent=5 // pred_check_branch
      %202 = sbr.rel (%p200) target = $region36
    $region35: #{residual_block_nobn.1} parent=5 // pred_region
      // Predicated region
      $region37: #{residual_block_nobn.1} parent=35 // pred_check
        %p203 = pneg %p32
      $region38: #{residual_block_nobn.1} parent=35 // pred_check_branch
        %205 = sbr.rel (%p203) target = $region40
      $region39: #{residual_block_nobn.1} parent=35 // pred_region
        %p206 = scmp.lt.s32.totalorder %s12, 1
        %s207 = scalar_select %p206, %s12, 1
        %s208 = smul.addr %s207, 17
        %s209 = smul.addr %s208, 8
        %s210 = scalar_lea.vmem %s0, %s209
      $region40: #{residual_block_nobn.1} parent=35 // pred_fallthru
        _
    $region36: #{residual_block_nobn.1} parent=5 // pred_fallthru
      _
    %p211 = scmp.le.s32.totalorder 1, %s12
    %p212 = scmp.lt.s32.totalorder %s12, 3
    %p213 = pnand %p211, %p212
    %p214 = pneg %p213
    // Predicated region
    $region41: #{residual_block_nobn.1} parent=5 // pred_check
      _
    $region42: #{residual_block_nobn.1} parent=5 // pred_check_branch
      %216 = sbr.rel (%p213) target = $region44
    $region43: #{residual_block_nobn.1} parent=5 // pred_region
      %s217 = ssub.s32 %s12, 1
      %p218 = scmp.lt.s32.totalorder %s17, 1
      %s219 = scalar_select %p218, %s17, 1
      %s220 = smul.addr %s219, 17
      %s221 = smul.addr %s220, 8
      %s222 = scalar_lea.vmem %s0, %s221
      %p223 = pneg %p38
      %p224 = pneg %p35
      %p225 = pneg %p59
      %p226 = pneg %p56
      %p227 = pneg %p80
      %p228 = pneg %p77
      %p229 = pneg %p101
      %p230 = pneg %p98
      %p231 = pneg %p122
      %p232 = pneg %p119
      %p233 = pneg %p143
      %p234 = pneg %p140
      %p235 = pneg %p169
      %p236 = pneg %p166
      %p237 = scmp.lt.s32.totalorder %s17, 1
      %s238 = scalar_select %p237, %s17, 1
      %s239 = smul.addr %s238, 13
      %s240 = smul.addr %s239, 8
      %s241 = scalar_lea.vmem %s6, %s240
      %p242 = scmp.lt.s32.totalorder %s17, 1
      %s243 = scalar_select %p242, %s17, 1
      %s244 = smul.addr %s243, 17
      %s245 = smul.addr %s244, 8
      %s246 = scalar_lea.vmem %s0, %s245
      %p247 = scmp.lt.s32.totalorder %s17, 1
      %s248 = scalar_select %p247, %s17, 1
      %s249 = smul.addr %s248, 13
      %s250 = smul.addr %s249, 8
      %s251 = scalar_lea.vmem %s6, %s250
      %v252 = vld [vmem:[%s246 + $0x5] sm:$0xff]
      %v253 = vld [vmem:[%s246 + $0xd] sm:$0xff]
      %v254 = vld [vmem:[%s246 + $0x15] sm:$0xff]
      %v255 = vld [vmem:[%s246 + $0x1d] sm:$0xff]
      %v256 = vld [vmem:[%s246 + $0x25] sm:$0xff]
      %v257 = vld [vmem:[%s246 + $0x2d] sm:$0xff]
      %v258 = vld [vmem:[%s246 + $0x35] sm:$0xff]
      %v259 = vld [vmem:[%s246 + $0x3d] sm:$0xff]
      %v260 = vld [vmem:[%s246 + $0x45] sm:$0xff]
      %v261 = vld [vmem:[%s246 + $0x4d] sm:$0xff]
      %v262 = vld [vmem:[%s246 + $0x55] sm:$0xff]
      %v263 = vld [vmem:[%s246 + $0x5d] sm:$0xff]
      %v264 = vld [vmem:[%s246 + $0x65] sm:$0xff]
      %v265 = vld [vmem:[%s246 + $0x6d] sm:$0xff]
      %v266 = vld [vmem:[%s246 + $0x75] sm:$0xff]
      %v267 = vld [vmem:[%s246 + $0x6] sm:$0xff]
      %v268 = vld [vmem:[%s246 + $0xe] sm:$0xff]
      %v269 = vld [vmem:[%s246 + $0x16] sm:$0xff]
      %v270 = vld [vmem:[%s246 + $0x1e] sm:$0xff]
      %v271 = vld [vmem:[%s246 + $0x26] sm:$0xff]
      %v272 = vld [vmem:[%s246 + $0x2e] sm:$0xff]
      %v273 = vld [vmem:[%s246 + $0x36] sm:$0xff]
      %v274 = vld [vmem:[%s246 + $0x3e] sm:$0xff]
      %v275 = vld [vmem:[%s246 + $0x46] sm:$0xff]
      %v276 = vld [vmem:[%s246 + $0x4e] sm:$0xff]
      %v277 = vld [vmem:[%s246 + $0x56] sm:$0xff]
      %v278 = vld [vmem:[%s246 + $0x5e] sm:$0xff]
      %v279 = vld [vmem:[%s246 + $0x66] sm:$0xff]
      %v280 = vld [vmem:[%s246 + $0x6e] sm:$0xff]
      %v281 = vld [vmem:[%s246 + $0x76] sm:$0xff]
      %v282 = vld [vmem:[%s246 + $0x7] sm:$0xff]
      %v283 = vld [vmem:[%s246 + $0xf] sm:$0xff]
      %v284 = vld [vmem:[%s246 + $0x17] sm:$0xff]
      %v285 = vld [vmem:[%s246 + $0x1f] sm:$0xff]
      %v286 = vld [vmem:[%s246 + $0x27] sm:$0xff]
      %v287 = vld [vmem:[%s246 + $0x2f] sm:$0xff]
      %v288 = vld [vmem:[%s246 + $0x37] sm:$0xff]
      %v289 = vld [vmem:[%s246 + $0x3f] sm:$0xff]
      %v290 = vld [vmem:[%s246 + $0x47] sm:$0xff]
      %v291 = vld [vmem:[%s246 + $0x4f] sm:$0xff]
      %v292 = vld [vmem:[%s246 + $0x57] sm:$0xff]
      %v293 = vld [vmem:[%s246 + $0x5f] sm:$0xff]
      %v294 = vld [vmem:[%s246 + $0x67] sm:$0xff]
      %v295 = vld [vmem:[%s246 + $0x6f] sm:$0xff]
      %v296 = vld [vmem:[%s246 + $0x77] sm:$0xff]
      %312 = vrot.lane.b32.xlu0 %v267, 64
      %v313 = vpop.permute.xlu0 %312
      %314 = vrot.lane.b32.xlu0 %v268, 64
      %v315 = vpop.permute.xlu0 %314
      %316 = vrot.lane.b32.xlu0 %v269, 64
      %v317 = vpop.permute.xlu0 %316
      %318 = vrot.lane.b32.xlu0 %v270, 64
      %v319 = vpop.permute.xlu0 %318
      %320 = vrot.lane.b32.xlu0 %v271, 64
      %v321 = vpop.permute.xlu0 %320
      %322 = vrot.lane.b32.xlu0 %v272, 64
      %v323 = vpop.permute.xlu0 %322
      %324 = vrot.lane.b32.xlu0 %v273, 64
      %v325 = vpop.permute.xlu0 %324
      %326 = vrot.lane.b32.xlu0 %v274, 64
      %v327 = vpop.permute.xlu0 %326
      %328 = vrot.lane.b32.xlu0 %v275, 64
      %v329 = vpop.permute.xlu0 %328
      %330 = vrot.lane.b32.xlu0 %v276, 64
      %v331 = vpop.permute.xlu0 %330
      %332 = vrot.lane.b32.xlu0 %v277, 64
      %v333 = vpop.permute.xlu0 %332
      %334 = vrot.lane.b32.xlu0 %v278, 64
      %v335 = vpop.permute.xlu0 %334
      %336 = vrot.lane.b32.xlu0 %v279, 64
      %v337 = vpop.permute.xlu0 %336
      %338 = vrot.lane.b32.xlu0 %v280, 64
      %v339 = vpop.permute.xlu0 %338
      %340 = vrot.lane.b32.xlu0 %v281, 64
      %v341 = vpop.permute.xlu0 %340
      %vm357 = vcmask 523264
      %v358 = vsel %vm357, %v252, %v313
      %v359 = vsel %vm357, %v253, %v315
      %v360 = vsel %vm357, %v254, %v317
      %v361 = vsel %vm357, %v255, %v319
      %v362 = vsel %vm357, %v256, %v321
      %v363 = vsel %vm357, %v257, %v323
      %v364 = vsel %vm357, %v258, %v325
      %v365 = vsel %vm357, %v259, %v327
      %v366 = vsel %vm357, %v260, %v329
      %v367 = vsel %vm357, %v261, %v331
      %v368 = vsel %vm357, %v262, %v333
      %v369 = vsel %vm357, %v263, %v335
      %v370 = vsel %vm357, %v264, %v337
      %v371 = vsel %vm357, %v265, %v339
      %v372 = vsel %vm357, %v266, %v341
      %v373 = vld [vmem:[%s2] sm:$0xff]
      %v374 = vld [vmem:[%s2 + $0x8] sm:$0xff]
      %v375 = vld [vmem:[%s2 + $0x10] sm:$0xff]
      %v376 = vld [vmem:[%s2 + $0x18] sm:$0xff]
      %v377 = vld [vmem:[%s2 + $0x20] sm:$0xff]
      %v378 = vld [vmem:[%s2 + $0x28] sm:$0xff]
      %v379 = vld [vmem:[%s2 + $0x30] sm:$0xff]
      %v380 = vld [vmem:[%s2 + $0x38] sm:$0xff]
      %v381 = vld [vmem:[%s2 + $0x40] sm:$0xff]
      %v382 = vld [vmem:[%s2 + $0x48] sm:$0xff]
      %v383 = vld [vmem:[%s2 + $0x50] sm:$0xff]
      %v384 = vld [vmem:[%s2 + $0x58] sm:$0xff]
      %v385 = vld [vmem:[%s2 + $0x60] sm:$0xff]
      %v386 = vld [vmem:[%s2 + $0x68] sm:$0xff]
      %v387 = vld [vmem:[%s2 + $0x70] sm:$0xff]
      %v388 = vld [vmem:[%s2 + $0x78] sm:$0xff]
      %v389 = vld [vmem:[%s2 + $0x80] sm:$0xff]
      %v390 = vld [vmem:[%s2 + $0x88] sm:$0xff]
      %v391 = vld [vmem:[%s2 + $0x90] sm:$0xff]
      %v392 = vld [vmem:[%s2 + $0x98] sm:$0xff]
      %v393 = vld [vmem:[%s2 + $0xa0] sm:$0xff]
      %v394 = vld [vmem:[%s2 + $0xa8] sm:$0xff]
      %v395 = vld [vmem:[%s2 + $0xb0] sm:$0xff]
      %v396 = vld [vmem:[%s2 + $0xb8] sm:$0xff]
      %s397 = scalar_lea.vmem %s2, 192
      %v398 = vld [vmem:[%s397] sm:$0xff]
      %v399 = vld [vmem:[%s397 + $0x8] sm:$0xff]
      %v400 = vld [vmem:[%s397 + $0x10] sm:$0xff]
      %v401 = vld [vmem:[%s397 + $0x18] sm:$0xff]
      %v402 = vld [vmem:[%s397 + $0x20] sm:$0xff]
      %v403 = vld [vmem:[%s397 + $0x28] sm:$0xff]
      %v404 = vld [vmem:[%s397 + $0x30] sm:$0xff]
      %v405 = vld [vmem:[%s397 + $0x38] sm:$0xff]
      %v406 = vld [vmem:[%s397 + $0x40] sm:$0xff]
      %v407 = vld [vmem:[%s397 + $0x48] sm:$0xff]
      %v408 = vld [vmem:[%s397 + $0x50] sm:$0xff]
      %v409 = vld [vmem:[%s397 + $0x58] sm:$0xff]
      %v410 = vld [vmem:[%s397 + $0x60] sm:$0xff]
      %v411 = vld [vmem:[%s397 + $0x68] sm:$0xff]
      %v412 = vld [vmem:[%s397 + $0x70] sm:$0xff]
      %v413 = vld [vmem:[%s397 + $0x78] sm:$0xff]
      %v414 = vld [vmem:[%s397 + $0x80] sm:$0xff]
      %v415 = vld [vmem:[%s397 + $0x88] sm:$0xff]
      %v416 = vld [vmem:[%s397 + $0x90] sm:$0xff]
      %v417 = vld [vmem:[%s397 + $0x98] sm:$0xff]
      %v418 = vld [vmem:[%s397 + $0xa0] sm:$0xff]
      %v419 = vld [vmem:[%s397 + $0xa8] sm:$0xff]
      %v420 = vld [vmem:[%s397 + $0xb0] sm:$0xff]
      %v421 = vld [vmem:[%s397 + $0xb8] sm:$0xff]
      %vm448 = vcmask 1045504
      %v449 = vrot.slane %v359, 2
      %v450 = vrot.slane %v360, 2
      %v451 = vsel %vm448, %v449, %v450
      %v452 = vrot.slane %v283, 2
      %v453 = vrot.slane %v284, 2
      %v454 = vsel %vm448, %v452, %v453
      %v455 = vrot.slane %v361, 2
      %v456 = vsel %vm448, %v450, %v455
      %v457 = vrot.slane %v285, 2
      %v458 = vsel %vm448, %v453, %v457
      %v459 = vrot.slane %v362, 2
      %v460 = vsel %vm448, %v455, %v459
      %v461 = vrot.slane %v286, 2
      %v462 = vsel %vm448, %v457, %v461
      %v463 = vrot.slane %v363, 2
      %v464 = vsel %vm448, %v459, %v463
      %v465 = vrot.slane %v287, 2
      %v466 = vsel %vm448, %v461, %v465
      %v467 = vrot.slane %v364, 2
      %v468 = vsel %vm448, %v463, %v467
      %v469 = vrot.slane %v288, 2
      %v470 = vsel %vm448, %v465, %v469
      %v471 = vrot.slane %v365, 2
      %v472 = vsel %vm448, %v467, %v471
      %v473 = vrot.slane %v289, 2
      %v474 = vsel %vm448, %v469, %v473
      %v475 = vrot.slane %v366, 2
      %v476 = vsel %vm448, %v471, %v475
      %v477 = vrot.slane %v290, 2
      %v478 = vsel %vm448, %v473, %v477
      %v479 = vrot.slane %v367, 2
      %v480 = vsel %vm448, %v475, %v479
      %v481 = vrot.slane %v291, 2
      %v482 = vsel %vm448, %v477, %v481
      %v483 = vrot.slane %v368, 2
      %v484 = vsel %vm448, %v479, %v483
      %v485 = vrot.slane %v292, 2
      %v486 = vsel %vm448, %v481, %v485
      %v487 = vrot.slane %v369, 2
      %v488 = vsel %vm448, %v483, %v487
      %v489 = vrot.slane %v293, 2
      %v490 = vsel %vm448, %v485, %v489
      %v491 = vrot.slane %v370, 2
      %v492 = vsel %vm448, %v487, %v491
      %v493 = vrot.slane %v294, 2
      %v494 = vsel %vm448, %v489, %v493
      %v495 = vrot.slane %v371, 2
      %v496 = vsel %vm448, %v491, %v495
      %v497 = vrot.slane %v295, 2
      %v498 = vsel %vm448, %v493, %v497
      %v512 = vsel %vm357, %v454, 0
      %v514 = vsel %vm357, %v458, 0
      %v516 = vsel %vm357, %v462, 0
      %v518 = vsel %vm357, %v466, 0
      %v520 = vsel %vm357, %v470, 0
      %v522 = vsel %vm357, %v474, 0
      %v524 = vsel %vm357, %v478, 0
      %v526 = vsel %vm357, %v482, 0
      %v528 = vsel %vm357, %v486, 0
      %v530 = vsel %vm357, %v490, 0
      %v532 = vsel %vm357, %v494, 0
      %v534 = vsel %vm357, %v498, 0
      %v536 = vsel %vm357, %v497, 0
      %538 = vmatprep.subr.mxu0 0.0
      %539 = vmatpush1.msra.mxu0 %v398
      %540 = vmatprep.subr.mxu0 0.0
      %541 = vmatpush1.msra.mxu0 %v399
      %542 = vmatprep.subr.mxu0 0.0
      %543 = vmatpush1.msra.mxu0 %v400
      %544 = vmatprep.subr.mxu0 0.0
      %545 = vmatpush1.msra.mxu0 %v401
      %546 = vmatprep.subr.mxu0 0.0
      %547 = vmatpush1.msra.mxu0 %v402
      %548 = vmatprep.subr.mxu0 0.0
      %549 = vmatpush1.msra.mxu0 %v403
      %550 = vmatprep.subr.mxu0 0.0
      %551 = vmatpush1.msra.mxu0 %v404
      %552 = vmatprep.subr.mxu0 0.0
      %553 = vmatpush1.msra.mxu0 %v405
      %554 = vmatprep.subr.mxu0 0.0
      %555 = vmatpush1.msra.mxu0 %v406
      %556 = vmatprep.subr.mxu0 0.0
      %557 = vmatpush1.msra.mxu0 %v407
      %558 = vmatprep.subr.mxu0 0.0
      %559 = vmatpush1.msra.mxu0 %v408
      %560 = vmatprep.subr.mxu0 0.0
      %561 = vmatpush1.msra.mxu0 %v409
      %562 = vmatprep.subr.mxu0 0.0
      %563 = vmatpush1.msra.mxu0 %v410
      %564 = vmatprep.subr.mxu0 0.0
      %565 = vmatpush1.msra.mxu0 %v411
      %566 = vmatprep.subr.mxu0 0.0
      %567 = vmatpush1.msra.mxu0 %v412
      %568 = vmatprep.subr.mxu0 0.0
      %569 = vmatpush1.msra.mxu0 %v413
      %570 = vmatprep.subr.mxu0 0.0
      %571 = vmatpush1.msra.mxu0 %v414
      %572 = vmatprep.subr.mxu0 0.0
      %573 = vmatpush1.msra.mxu0 %v415
      %574 = vmatprep.subr.mxu0 0.0
      %575 = vmatpush1.msra.mxu0 %v416
      %576 = vmatprep.subr.mxu0 0.0
      %577 = vmatpush1.msra.mxu0 %v417
      %578 = vmatprep.subr.mxu0 0.0
      %579 = vmatpush1.msra.mxu0 %v418
      %580 = vmatprep.subr.mxu0 0.0
      %581 = vmatpush1.msra.mxu0 %v419
      %582 = vmatprep.subr.mxu0 0.0
      %583 = vmatpush1.msra.mxu0 %v420
      %584 = vmatprep.subr.mxu0 0.0
      %585 = vmatpush1.msra.mxu0 %v421
      %586 = vmatprep.subr.mxu0 0.0
      %587 = vmatpush1.msra.mxu0 0.0
      %588 = vmatprep.subr.mxu0 0.0
      %589 = vmatpush1.msra.mxu0 0.0
      %590 = vmatprep.subr.mxu0 0.0
      %591 = vmatpush1.msra.mxu0 0.0
      %592 = vmatprep.subr.mxu0 0.0
      %593 = vmatpush1.msra.mxu0 0.0
      %594 = vmatprep.subr.mxu0 0.0
      %595 = vmatpush1.msra.mxu0 0.0
      %596 = vmatprep.subr.mxu0 0.0
      %597 = vmatpush1.msra.mxu0 0.0
      %598 = vmatprep.subr.mxu0 0.0
      %599 = vmatpush1.msra.mxu0 0.0
      %600 = vmatprep.subr.mxu0 0.0
      %601 = vmatpush1.msra.mxu0 0.0
      %602 = vmatprep.mubr.f32.mxu0 %v512
      %603 = vmatmul.mubr.f32.gmra.mrb[0].mxu0 %v451
      %v604 = vpop.f32.mrb[0].mxu0
      %v605 = vadd.f32 0.0, %v604
      %v606 = vpop.f32.mrb[0].mxu0
      %607 = vmatprep.mubr.f32.mxu0 %v514
      %608 = vmatmul.mubr.f32.gmra.mrb[0].mxu0 %v456
      %v609 = vpop.f32.mrb[0].mxu0
      %v610 = vadd.f32 0.0, %v609
      %v611 = vpop.f32.mrb[0].mxu0
      %612 = vmatprep.mubr.f32.mxu0 %v516
      %613 = vmatmul.mubr.f32.gmra.mrb[0].mxu0 %v460
      %v614 = vpop.f32.mrb[0].mxu0
      %v615 = vadd.f32 0.0, %v614
      %v616 = vpop.f32.mrb[0].mxu0
      %617 = vmatprep.mubr.f32.mxu0 %v518
      %618 = vmatmul.mubr.f32.gmra.mrb[0].mxu0 %v464
      %v619 = vpop.f32.mrb[0].mxu0
      %v620 = vadd.f32 0.0, %v619
      %v621 = vpop.f32.mrb[0].mxu0
      %622 = vmatprep.mubr.f32.mxu0 %v520
      %623 = vmatmul.mubr.f32.gmra.mrb[0].mxu0 %v468
      %v624 = vpop.f32.mrb[0].mxu0
      %v625 = vadd.f32 0.0, %v624
      %v626 = vpop.f32.mrb[0].mxu0
      %627 = vmatprep.mubr.f32.mxu0 %v522
      %628 = vmatmul.mubr.f32.gmra.mrb[0].mxu0 %v472
      %v629 = vpop.f32.mrb[0].mxu0
      %v630 = vadd.f32 0.0, %v629
      %v631 = vpop.f32.mrb[0].mxu0
      %632 = vmatprep.mubr.f32.mxu0 %v524
      %633 = vmatmul.mubr.f32.gmra.mrb[0].mxu0 %v476
      %v634 = vpop.f32.mrb[0].mxu0
      %v635 = vadd.f32 0.0, %v634
      %v636 = vpop.f32.mrb[0].mxu0
      %637 = vmatprep.mubr.f32.mxu0 %v526
      %638 = vmatmul.mubr.f32.gmra.mrb[0].mxu0 %v480
      %v639 = vpop.f32.mrb[0].mxu0
      %v640 = vadd.f32 0.0, %v639
      %v641 = vpop.f32.mrb[0].mxu0
      %642 = vmatprep.mubr.f32.mxu0 %v528
      %643 = vmatmul.mubr.f32.gmra.mrb[0].mxu0 %v484
      %v644 = vpop.f32.mrb[0].mxu0
      %v645 = vadd.f32 0.0, %v644
      %v646 = vpop.f32.mrb[0].mxu0
      %647 = vmatprep.mubr.f32.mxu0 %v530
      %648 = vmatmul.mubr.f32.gmra.mrb[0].mxu0 %v488
      %v649 = vpop.f32.mrb[0].mxu0
      %v650 = vadd.f32 0.0, %v649
      %v651 = vpop.f32.mrb[0].mxu0
      %652 = vmatprep.mubr.f32.mxu0 %v532
      %653 = vmatmul.mubr.f32.gmra.mrb[0].mxu0 %v492
      %v654 = vpop.f32.mrb[0].mxu0
      %v655 = vadd.f32 0.0, %v654
      %v656 = vpop.f32.mrb[0].mxu0
      %657 = vmatprep.mubr.f32.mxu0 %v534
      %658 = vmatmul.mubr.f32.gmra.mrb[0].mxu0 %v496
      %v659 = vpop.f32.mrb[0].mxu0
      %v660 = vadd.f32 0.0, %v659
      %v661 = vpop.f32.mrb[0].mxu0
      %662 = vmatprep.mubr.f32.mxu0 %v536
      %663 = vmatmul.mubr.f32.gmra.mrb[0].mxu0 %v495
      %v664 = vpop.f32.mrb[0].mxu0
      %v665 = vadd.f32 0.0, %v664
      %v666 = vpop.f32.mrb[0].mxu0
      %667 = vdwg.mxu0
      %v669 = vsel %vm357, %v282, 0
      %v671 = vsel %vm357, %v283, 0
      %v673 = vsel %vm357, %v284, 0
      %v675 = vsel %vm357, %v285, 0
      %v677 = vsel %vm357, %v286, 0
      %v679 = vsel %vm357, %v287, 0
      %v681 = vsel %vm357, %v288, 0
      %v683 = vsel %vm357, %v289, 0
      %v685 = vsel %vm357, %v290, 0
      %v687 = vsel %vm357, %v291, 0
      %v689 = vsel %vm357, %v292, 0
      %v691 = vsel %vm357, %v293, 0
      %v693 = vsel %vm357, %v294, 0
      %695 = vmatprep.subr.mxu0 0.0
      %696 = vmatpush1.msra.mxu0 %v373
      %697 = vmatprep.subr.mxu0 0.0
      %698 = vmatpush1.msra.mxu0 %v374
      %699 = vmatprep.subr.mxu0 0.0
      %700 = vmatpush1.msra.mxu0 %v375
      %701 = vmatprep.subr.mxu0 0.0
      %702 = vmatpush1.msra.mxu0 %v376
      %703 = vmatprep.subr.mxu0 0.0
      %704 = vmatpush1.msra.mxu0 %v377
      %705 = vmatprep.subr.mxu0 0.0
      %706 = vmatpush1.msra.mxu0 %v378
      %707 = vmatprep.subr.mxu0 0.0
      %708 = vmatpush1.msra.mxu0 %v379
      %709 = vmatprep.subr.mxu0 0.0
      %710 = vmatpush1.msra.mxu0 %v380
      %711 = vmatprep.subr.mxu0 0.0
      %712 = vmatpush1.msra.mxu0 %v381
      %713 = vmatprep.subr.mxu0 0.0
      %714 = vmatpush1.msra.mxu0 %v382
      %715 = vmatprep.subr.mxu0 0.0
      %716 = vmatpush1.msra.mxu0 %v383
      %717 = vmatprep.subr.mxu0 0.0
      %718 = vmatpush1.msra.mxu0 %v384
      %719 = vmatprep.subr.mxu0 0.0
      %720 = vmatpush1.msra.mxu0 %v385
      %721 = vmatprep.subr.mxu0 0.0
      %722 = vmatpush1.msra.mxu0 %v386
      %723 = vmatprep.subr.mxu0 0.0
      %724 = vmatpush1.msra.mxu0 %v387
      %725 = vmatprep.subr.mxu0 0.0
      %726 = vmatpush1.msra.mxu0 %v388
      %727 = vmatprep.subr.mxu0 0.0
      %728 = vmatpush1.msra.mxu0 %v389
      %729 = vmatprep.subr.mxu0 0.0
      %730 = vmatpush1.msra.mxu0 %v390
      %731 = vmatprep.subr.mxu0 0.0
      %732 = vmatpush1.msra.mxu0 %v391
      %733 = vmatprep.subr.mxu0 0.0
      %734 = vmatpush1.msra.mxu0 %v392
      %735 = vmatprep.subr.mxu0 0.0
      %736 = vmatpush1.msra.mxu0 %v393
      %737 = vmatprep.subr.mxu0 0.0
      %738 = vmatpush1.msra.mxu0 %v394
      %739 = vmatprep.subr.mxu0 0.0
      %740 = vmatpush1.msra.mxu0 %v395
      %741 = vmatprep.subr.mxu0 0.0
      %742 = vmatpush1.msra.mxu0 %v396
      %743 = vmatprep.subr.mxu0 0.0
      %744 = vmatpush1.msra.mxu0 0.0
      %745 = vmatprep.subr.mxu0 0.0
      %746 = vmatpush1.msra.mxu0 0.0
      %747 = vmatprep.subr.mxu0 0.0
      %748 = vmatpush1.msra.mxu0 0.0
      %749 = vmatprep.subr.mxu0 0.0
      %750 = vmatpush1.msra.mxu0 0.0
      %751 = vmatprep.subr.mxu0 0.0
      %752 = vmatpush1.msra.mxu0 0.0
      %753 = vmatprep.subr.mxu0 0.0
      %754 = vmatpush1.msra.mxu0 0.0
      %755 = vmatprep.subr.mxu0 0.0
      %756 = vmatpush1.msra.mxu0 0.0
      %757 = vmatprep.subr.mxu0 0.0
      %758 = vmatpush1.msra.mxu0 0.0
      %759 = vmatprep.mubr.f32.mxu0 %v669
      %760 = vmatmul.mubr.f32.gmra.mrb[0].mxu0 %v358
      %v761 = vpop.f32.mrb[0].mxu0
      %v762 = vadd.f32 %v605, %v761
      %v763 = vpop.f32.mrb[0].mxu0
      %764 = vmatprep.mubr.f32.mxu0 %v671
      %765 = vmatmul.mubr.f32.gmra.mrb[0].mxu0 %v359
      %v766 = vpop.f32.mrb[0].mxu0
      %v767 = vadd.f32 %v610, %v766
      %v768 = vpop.f32.mrb[0].mxu0
      %769 = vmatprep.mubr.f32.mxu0 %v673
      %770 = vmatmul.mubr.f32.gmra.mrb[0].mxu0 %v360
      %v771 = vpop.f32.mrb[0].mxu0
      %v772 = vadd.f32 %v615, %v771
      %v773 = vpop.f32.mrb[0].mxu0
      %774 = vmatprep.mubr.f32.mxu0 %v675
      %775 = vmatmul.mubr.f32.gmra.mrb[0].mxu0 %v361
      %v776 = vpop.f32.mrb[0].mxu0
      %v777 = vadd.f32 %v620, %v776
      %v778 = vpop.f32.mrb[0].mxu0
      %779 = vmatprep.mubr.f32.mxu0 %v677
      %780 = vmatmul.mubr.f32.gmra.mrb[0].mxu0 %v362
      %v781 = vpop.f32.mrb[0].mxu0
      %v782 = vadd.f32 %v625, %v781
      %v783 = vpop.f32.mrb[0].mxu0
      %784 = vmatprep.mubr.f32.mxu0 %v679
      %785 = vmatmul.mubr.f32.gmra.mrb[0].mxu0 %v363
      %v786 = vpop.f32.mrb[0].mxu0
      %v787 = vadd.f32 %v630, %v786
      %v788 = vpop.f32.mrb[0].mxu0
      %789 = vmatprep.mubr.f32.mxu0 %v681
      %790 = vmatmul.mubr.f32.gmra.mrb[0].mxu0 %v364
      %v791 = vpop.f32.mrb[0].mxu0
      %v792 = vadd.f32 %v635, %v791
      %v793 = vpop.f32.mrb[0].mxu0
      %794 = vmatprep.mubr.f32.mxu0 %v683
      %795 = vmatmul.mubr.f32.gmra.mrb[0].mxu0 %v365
      %v796 = vpop.f32.mrb[0].mxu0
      %v797 = vadd.f32 %v640, %v796
      %v798 = vpop.f32.mrb[0].mxu0
      %799 = vmatprep.mubr.f32.mxu0 %v685
      %800 = vmatmul.mubr.f32.gmra.mrb[0].mxu0 %v366
      %v801 = vpop.f32.mrb[0].mxu0
      %v802 = vadd.f32 %v645, %v801
      %v803 = vpop.f32.mrb[0].mxu0
      %804 = vmatprep.mubr.f32.mxu0 %v687
      %805 = vmatmul.mubr.f32.gmra.mrb[0].mxu0 %v367
      %v806 = vpop.f32.mrb[0].mxu0
      %v807 = vadd.f32 %v650, %v806
      %v808 = vpop.f32.mrb[0].mxu0
      %809 = vmatprep.mubr.f32.mxu0 %v689
      %810 = vmatmul.mubr.f32.gmra.mrb[0].mxu0 %v368
      %v811 = vpop.f32.mrb[0].mxu0
      %v812 = vadd.f32 %v655, %v811
      %v813 = vpop.f32.mrb[0].mxu0
      %814 = vmatprep.mubr.f32.mxu0 %v691
      %815 = vmatmul.mubr.f32.gmra.mrb[0].mxu0 %v369
      %v816 = vpop.f32.mrb[0].mxu0
      %v817 = vadd.f32 %v660, %v816
      %v818 = vpop.f32.mrb[0].mxu0
      %819 = vmatprep.mubr.f32.mxu0 %v693
      %820 = vmatmul.mubr.f32.gmra.mrb[0].mxu0 %v370
      %v821 = vpop.f32.mrb[0].mxu0
      %v822 = vadd.f32 %v665, %v821
      %v823 = vpop.f32.mrb[0].mxu0
      %824 = vdwg.mxu0
      %s825 = scalar_lea.vmem %s2, 384
      %v826 = vld [vmem:[%s825] sm:$0xff]
      %v827 = vld [vmem:[%s825 + $0x8] sm:$0xff]
      %v828 = vld [vmem:[%s825 + $0x10] sm:$0xff]
      %v829 = vld [vmem:[%s825 + $0x18] sm:$0xff]
      %v830 = vld [vmem:[%s825 + $0x20] sm:$0xff]
      %v831 = vld [vmem:[%s825 + $0x28] sm:$0xff]
      %v832 = vld [vmem:[%s825 + $0x30] sm:$0xff]
      %v833 = vld [vmem:[%s825 + $0x38] sm:$0xff]
      %v834 = vld [vmem:[%s825 + $0x40] sm:$0xff]
      %v835 = vld [vmem:[%s825 + $0x48] sm:$0xff]
      %v836 = vld [vmem:[%s825 + $0x50] sm:$0xff]
      %v837 = vld [vmem:[%s825 + $0x58] sm:$0xff]
      %v838 = vld [vmem:[%s825 + $0x60] sm:$0xff]
      %v839 = vld [vmem:[%s825 + $0x68] sm:$0xff]
      %v840 = vld [vmem:[%s825 + $0x70] sm:$0xff]
      %v841 = vld [vmem:[%s825 + $0x78] sm:$0xff]
      %v842 = vld [vmem:[%s825 + $0x80] sm:$0xff]
      %v843 = vld [vmem:[%s825 + $0x88] sm:$0xff]
      %v844 = vld [vmem:[%s825 + $0x90] sm:$0xff]
      %v845 = vld [vmem:[%s825 + $0x98] sm:$0xff]
      %v846 = vld [vmem:[%s825 + $0xa0] sm:$0xff]
      %v847 = vld [vmem:[%s825 + $0xa8] sm:$0xff]
      %v848 = vld [vmem:[%s825 + $0xb0] sm:$0xff]
      %v849 = vld [vmem:[%s825 + $0xb8] sm:$0xff]
      %vm852 = vcmask 1043456
      %v853 = vrot.slane %v360, 4
      %v854 = vrot.slane %v361, 4
      %v855 = vsel %vm852, %v853, %v854
      %v856 = vrot.slane %v284, 4
      %v857 = vrot.slane %v285, 4
      %v858 = vsel %vm852, %v856, %v857
      %v859 = vrot.slane %v362, 4
      %v860 = vsel %vm852, %v854, %v859
      %v861 = vrot.slane %v286, 4
      %v862 = vsel %vm852, %v857, %v861
      %v863 = vrot.slane %v363, 4
      %v864 = vsel %vm852, %v859, %v863
      %v865 = vrot.slane %v287, 4
      %v866 = vsel %vm852, %v861, %v865
      %v867 = vrot.slane %v364, 4
      %v868 = vsel %vm852, %v863, %v867
      %v869 = vrot.slane %v288, 4
      %v870 = vsel %vm852, %v865, %v869
      %v871 = vrot.slane %v365, 4
      %v872 = vsel %vm852, %v867, %v871
      %v873 = vrot.slane %v289, 4
      %v874 = vsel %vm852, %v869, %v873
      %v875 = vrot.slane %v366, 4
      %v876 = vsel %vm852, %v871, %v875
      %v877 = vrot.slane %v290, 4
      %v878 = vsel %vm852, %v873, %v877
      %v879 = vrot.slane %v367, 4
      %v880 = vsel %vm852, %v875, %v879
      %v881 = vrot.slane %v291, 4
      %v882 = vsel %vm852, %v877, %v881
      %v883 = vrot.slane %v368, 4
      %v884 = vsel %vm852, %v879, %v883
      %v885 = vrot.slane %v292, 4
      %v886 = vsel %vm852, %v881, %v885
      %v887 = vrot.slane %v369, 4
      %v888 = vsel %vm852, %v883, %v887
      %v889 = vrot.slane %v293, 4
      %v890 = vsel %vm852, %v885, %v889
      %v891 = vrot.slane %v370, 4
      %v892 = vsel %vm852, %v887, %v891
      %v893 = vrot.slane %v294, 4
      %v894 = vsel %vm852, %v889, %v893
      %v895 = vrot.slane %v371, 4
      %v896 = vsel %vm852, %v891, %v895
      %v897 = vrot.slane %v295, 4
      %v898 = vsel %vm852, %v893, %v897
      %v899 = vrot.slane %v372, 4
      %v900 = vsel %vm852, %v895, %v899
      %v901 = vrot.slane %v296, 4
      %v902 = vsel %vm852, %v897, %v901
      %v916 = vsel %vm357, %v858, 0
      %v918 = vsel %vm357, %v862, 0
      %v920 = vsel %vm357, %v866, 0
      %v922 = vsel %vm357, %v870, 0
      %v924 = vsel %vm357, %v874, 0
      %v926 = vsel %vm357, %v878, 0
      %v928 = vsel %vm357, %v882, 0
      %v930 = vsel %vm357, %v886, 0
      %v932 = vsel %vm357, %v890, 0
      %v934 = vsel %vm357, %v894, 0
      %v936 = vsel %vm357, %v898, 0
      %v938 = vsel %vm357, %v902, 0
      %v940 = vsel %vm357, %v901, 0
      %942 = vmatprep.subr.mxu0 0.0
      %943 = vmatpush1.msra.mxu0 %v826
      %944 = vmatprep.subr.mxu0 0.0
      %945 = vmatpush1.msra.mxu0 %v827
      %946 = vmatprep.subr.mxu0 0.0
      %947 = vmatpush1.msra.mxu0 %v828
      %948 = vmatprep.subr.mxu0 0.0
      %949 = vmatpush1.msra.mxu0 %v829
      %950 = vmatprep.subr.mxu0 0.0
      %951 = vmatpush1.msra.mxu0 %v830
      %952 = vmatprep.subr.mxu0 0.0
      %953 = vmatpush1.msra.mxu0 %v831
      %954 = vmatprep.subr.mxu0 0.0
      %955 = vmatpush1.msra.mxu0 %v832
      %956 = vmatprep.subr.mxu0 0.0
      %957 = vmatpush1.msra.mxu0 %v833
      %958 = vmatprep.subr.mxu0 0.0
      %959 = vmatpush1.msra.mxu0 %v834
      %960 = vmatprep.subr.mxu0 0.0
      %961 = vmatpush1.msra.mxu0 %v835
      %962 = vmatprep.subr.mxu0 0.0
      %963 = vmatpush1.msra.mxu0 %v836
      %964 = vmatprep.subr.mxu0 0.0
      %965 = vmatpush1.msra.mxu0 %v837
      %966 = vmatprep.subr.mxu0 0.0
      %967 = vmatpush1.msra.mxu0 %v838
      %968 = vmatprep.subr.mxu0 0.0
      %969 = vmatpush1.msra.mxu0 %v839
      %970 = vmatprep.subr.mxu0 0.0
      %971 = vmatpush1.msra.mxu0 %v840
      %972 = vmatprep.subr.mxu0 0.0
      %973 = vmatpush1.msra.mxu0 %v841
      %974 = vmatprep.subr.mxu0 0.0
      %975 = vmatpush1.msra.mxu0 %v842
      %976 = vmatprep.subr.mxu0 0.0
      %977 = vmatpush1.msra.mxu0 %v843
      %978 = vmatprep.subr.mxu0 0.0
      %979 = vmatpush1.msra.mxu0 %v844
      %980 = vmatprep.subr.mxu0 0.0
      %981 = vmatpush1.msra.mxu0 %v845
      %982 = vmatprep.subr.mxu0 0.0
      %983 = vmatpush1.msra.mxu0 %v846
      %984 = vmatprep.subr.mxu0 0.0
      %985 = vmatpush1.msra.mxu0 %v847
      %986 = vmatprep.subr.mxu0 0.0
      %987 = vmatpush1.msra.mxu0 %v848
      %988 = vmatprep.subr.mxu0 0.0
      %989 = vmatpush1.msra.mxu0 %v849
      %990 = vmatprep.subr.mxu0 0.0
      %991 = vmatpush1.msra.mxu0 0.0
      %992 = vmatprep.subr.mxu0 0.0
      %993 = vmatpush1.msra.mxu0 0.0
      %994 = vmatprep.subr.mxu0 0.0
      %995 = vmatpush1.msra.mxu0 0.0
      %996 = vmatprep.subr.mxu0 0.0
      %997 = vmatpush1.msra.mxu0 0.0
      %998 = vmatprep.subr.mxu0 0.0
      %999 = vmatpush1.msra.mxu0 0.0
      %1000 = vmatprep.subr.mxu0 0.0
      %1001 = vmatpush1.msra.mxu0 0.0
      %1002 = vmatprep.subr.mxu0 0.0
      %1003 = vmatpush1.msra.mxu0 0.0
      %1004 = vmatprep.subr.mxu0 0.0
      %1005 = vmatpush1.msra.mxu0 0.0
      %1006 = vmatprep.mubr.f32.mxu0 %v916
      %1007 = vmatmul.mubr.f32.gmra.mrb[0].mxu0 %v855
      %v1008 = vpop.f32.mrb[0].mxu0
      %v1009 = vadd.f32 0.0, %v1008
      %v1010 = vpop.f32.mrb[0].mxu0
      %1011 = vmatprep.mubr.f32.mxu0 %v918
      %1012 = vmatmul.mubr.f32.gmra.mrb[0].mxu0 %v860
      %v1013 = vpop.f32.mrb[0].mxu0
      %v1014 = vadd.f32 0.0, %v1013
      %v1015 = vpop.f32.mrb[0].mxu0
      %1016 = vmatprep.mubr.f32.mxu0 %v920
      %1017 = vmatmul.mubr.f32.gmra.mrb[0].mxu0 %v864
      %v1018 = vpop.f32.mrb[0].mxu0
      %v1019 = vadd.f32 0.0, %v1018
      %v1020 = vpop.f32.mrb[0].mxu0
      %1021 = vmatprep.mubr.f32.mxu0 %v922
      %1022 = vmatmul.mubr.f32.gmra.mrb[0].mxu0 %v868
      %v1023 = vpop.f32.mrb[0].mxu0
      %v1024 = vadd.f32 0.0, %v1023
      %v1025 = vpop.f32.mrb[0].mxu0
      %1026 = vmatprep.mubr.f32.mxu0 %v924
      %1027 = vmatmul.mubr.f32.gmra.mrb[0].mxu0 %v872
      %v1028 = vpop.f32.mrb[0].mxu0
      %v1029 = vadd.f32 0.0, %v1028
      %v1030 = vpop.f32.mrb[0].mxu0
      %1031 = vmatprep.mubr.f32.mxu0 %v926
      %1032 = vmatmul.mubr.f32.gmra.mrb[0].mxu0 %v876
      %v1033 = vpop.f32.mrb[0].mxu0
      %v1034 = vadd.f32 0.0, %v1033
      %v1035 = vpop.f32.mrb[0].mxu0
      %1036 = vmatprep.mubr.f32.mxu0 %v928
      %1037 = vmatmul.mubr.f32.gmra.mrb[0].mxu0 %v880
      %v1038 = vpop.f32.mrb[0].mxu0
      %v1039 = vadd.f32 0.0, %v1038
      %v1040 = vpop.f32.mrb[0].mxu0
      %1041 = vmatprep.mubr.f32.mxu0 %v930
      %1042 = vmatmul.mubr.f32.gmra.mrb[0].mxu0 %v884
      %v1043 = vpop.f32.mrb[0].mxu0
      %v1044 = vadd.f32 0.0, %v1043
      %v1045 = vpop.f32.mrb[0].mxu0
      %1046 = vmatprep.mubr.f32.mxu0 %v932
      %1047 = vmatmul.mubr.f32.gmra.mrb[0].mxu0 %v888
      %v1048 = vpop.f32.mrb[0].mxu0
      %v1049 = vadd.f32 0.0, %v1048
      %v1050 = vpop.f32.mrb[0].mxu0
      %1051 = vmatprep.mubr.f32.mxu0 %v934
      %1052 = vmatmul.mubr.f32.gmra.mrb[0].mxu0 %v892
      %v1053 = vpop.f32.mrb[0].mxu0
      %v1054 = vadd.f32 0.0, %v1053
      %v1055 = vpop.f32.mrb[0].mxu0
      %1056 = vmatprep.mubr.f32.mxu0 %v936
      %1057 = vmatmul.mubr.f32.gmra.mrb[0].mxu0 %v896
      %v1058 = vpop.f32.mrb[0].mxu0
      %v1059 = vadd.f32 0.0, %v1058
      %v1060 = vpop.f32.mrb[0].mxu0
      %1061 = vmatprep.mubr.f32.mxu0 %v938
      %1062 = vmatmul.mubr.f32.gmra.mrb[0].mxu0 %v900
      %v1063 = vpop.f32.mrb[0].mxu0
      %v1064 = vadd.f32 0.0, %v1063
      %v1065 = vpop.f32.mrb[0].mxu0
      %1066 = vmatprep.mubr.f32.mxu0 %v940
      %1067 = vmatmul.mubr.f32.gmra.mrb[0].mxu0 %v899
      %v1068 = vpop.f32.mrb[0].mxu0
      %v1069 = vadd.f32 0.0, %v1068
      %v1070 = vpop.f32.mrb[0].mxu0
      %1071 = vdwg.mxu0
      %v1072 = vadd.f32 %v762, %v1009
      %v1073 = vadd.f32 %v767, %v1014
      %v1074 = vadd.f32 %v772, %v1019
      %v1075 = vadd.f32 %v777, %v1024
      %v1076 = vadd.f32 %v782, %v1029
      %v1077 = vadd.f32 %v787, %v1034
      %v1078 = vadd.f32 %v792, %v1039
      %v1079 = vadd.f32 %v797, %v1044
      %v1080 = vadd.f32 %v802, %v1049
      %v1081 = vadd.f32 %v807, %v1054
      %v1082 = vadd.f32 %v812, %v1059
      %v1083 = vadd.f32 %v817, %v1064
      %v1084 = vadd.f32 %v822, %v1069
      %v1085 = vld [vmem:[%s3] sm:$0x1]
      %v1087 = vlaneseq
      %v1088 = vshrl.u32 %v1087, 7
      %v1089 = vsub.s32 0, %v1088
      %v1090 = vrot.slane %v1085, %v1089
      %v1092 = vadd.f32 %v1072, %v1090
      %v1093 = vadd.f32 %v1073, %v1090
      %v1094 = vadd.f32 %v1074, %v1090
      %v1095 = vadd.f32 %v1075, %v1090
      %v1096 = vadd.f32 %v1076, %v1090
      %v1097 = vadd.f32 %v1077, %v1090
      %v1098 = vadd.f32 %v1078, %v1090
      %v1099 = vadd.f32 %v1079, %v1090
      %v1100 = vadd.f32 %v1080, %v1090
      %v1101 = vadd.f32 %v1081, %v1090
      %v1102 = vadd.f32 %v1082, %v1090
      %v1103 = vadd.f32 %v1083, %v1090
      %v1104 = vadd.f32 %v1084, %v1090
      %vm1105 = vcmp.gt.f32.partialorder %v1092, 0.0
      %vm1106 = vcmp.gt.f32.partialorder %v1093, 0.0
      %vm1107 = vcmp.gt.f32.partialorder %v1094, 0.0
      %vm1108 = vcmp.gt.f32.partialorder %v1095, 0.0
      %vm1109 = vcmp.gt.f32.partialorder %v1096, 0.0
      %vm1110 = vcmp.gt.f32.partialorder %v1097, 0.0
      %vm1111 = vcmp.gt.f32.partialorder %v1098, 0.0
      %vm1112 = vcmp.gt.f32.partialorder %v1099, 0.0
      %vm1113 = vcmp.gt.f32.partialorder %v1100, 0.0
      %vm1114 = vcmp.gt.f32.partialorder %v1101, 0.0
      %vm1115 = vcmp.gt.f32.partialorder %v1102, 0.0
      %vm1116 = vcmp.gt.f32.partialorder %v1103, 0.0
      %vm1117 = vcmp.gt.f32.partialorder %v1104, 0.0
      %v1118 = vmul.f32 %v1092, 0.2
      %v1119 = vmul.f32 %v1093, 0.2
      %v1120 = vmul.f32 %v1094, 0.2
      %v1121 = vmul.f32 %v1095, 0.2
      %v1122 = vmul.f32 %v1096, 0.2
      %v1123 = vmul.f32 %v1097, 0.2
      %v1124 = vmul.f32 %v1098, 0.2
      %v1125 = vmul.f32 %v1099, 0.2
      %v1126 = vmul.f32 %v1100, 0.2
      %v1127 = vmul.f32 %v1101, 0.2
      %v1128 = vmul.f32 %v1102, 0.2
      %v1129 = vmul.f32 %v1103, 0.2
      %v1130 = vmul.f32 %v1104, 0.2
      %v1131 = vsel %vm1105, %v1092, %v1118
      %v1132 = vsel %vm1106, %v1093, %v1119
      %v1133 = vsel %vm1107, %v1094, %v1120
      %v1134 = vsel %vm1108, %v1095, %v1121
      %v1135 = vsel %vm1109, %v1096, %v1122
      %v1136 = vsel %vm1110, %v1097, %v1123
      %v1137 = vsel %vm1111, %v1098, %v1124
      %v1138 = vsel %vm1112, %v1099, %v1125
      %v1139 = vsel %vm1113, %v1100, %v1126
      %v1140 = vsel %vm1114, %v1101, %v1127
      %v1141 = vsel %vm1115, %v1102, %v1128
      %v1142 = vsel %vm1116, %v1103, %v1129
      %v1143 = vsel %vm1117, %v1104, %v1130
      %v1144 = vld [vmem:[%s1] sm:$0xff]
      %v1145 = vld [vmem:[%s1 + $0x8] sm:$0xff]
      %v1146 = vld [vmem:[%s1 + $0x10] sm:$0xff]
      %v1147 = vld [vmem:[%s1 + $0x18] sm:$0xff]
      %v1148 = vld [vmem:[%s1 + $0x20] sm:$0xff]
      %v1149 = vld [vmem:[%s1 + $0x28] sm:$0xff]
      %v1150 = vld [vmem:[%s1 + $0x30] sm:$0xff]
      %v1151 = vld [vmem:[%s1 + $0x38] sm:$0xff]
      %v1152 = vld [vmem:[%s1 + $0x40] sm:$0xff]
      %v1153 = vld [vmem:[%s1 + $0x48] sm:$0xff]
      %v1154 = vld [vmem:[%s1 + $0x50] sm:$0xff]
      %v1155 = vld [vmem:[%s1 + $0x58] sm:$0xff]
      %v1156 = vld [vmem:[%s1 + $0x60] sm:$0xf]
      %1158 = vset.pattern.permute.xlu0 0
      %1159 = vperm.xlu0 %1158, %v1144
      %v1160 = vpop.permute.xlu0 %1159
      %1163 = vset.pattern.permute.xlu0 0
      %1164 = vperm.xlu0 %1163, %v1145
      %v1165 = vpop.permute.xlu0 %1164
      %1168 = vset.pattern.permute.xlu0 0
      %1169 = vperm.xlu0 %1168, %v1146
      %v1170 = vpop.permute.xlu0 %1169
      %1173 = vset.pattern.permute.xlu0 0
      %1174 = vperm.xlu0 %1173, %v1147
      %v1175 = vpop.permute.xlu0 %1174
      %1178 = vset.pattern.permute.xlu0 0
      %1179 = vperm.xlu0 %1178, %v1148
      %v1180 = vpop.permute.xlu0 %1179
      %1183 = vset.pattern.permute.xlu0 0
      %1184 = vperm.xlu0 %1183, %v1149
      %v1185 = vpop.permute.xlu0 %1184
      %1188 = vset.pattern.permute.xlu0 0
      %1189 = vperm.xlu0 %1188, %v1150
      %v1190 = vpop.permute.xlu0 %1189
      %1193 = vset.pattern.permute.xlu0 0
      %1194 = vperm.xlu0 %1193, %v1151
      %v1195 = vpop.permute.xlu0 %1194
      %1198 = vset.pattern.permute.xlu0 0
      %1199 = vperm.xlu0 %1198, %v1152
      %v1200 = vpop.permute.xlu0 %1199
      %1203 = vset.pattern.permute.xlu0 0
      %1204 = vperm.xlu0 %1203, %v1153
      %v1205 = vpop.permute.xlu0 %1204
      %1208 = vset.pattern.permute.xlu0 0
      %1209 = vperm.xlu0 %1208, %v1154
      %v1210 = vpop.permute.xlu0 %1209
      %1213 = vset.pattern.permute.xlu0 0
      %1214 = vperm.xlu0 %1213, %v1155
      %v1215 = vpop.permute.xlu0 %1214
      %1218 = vset.pattern.permute.xlu0 0
      %1219 = vperm.xlu0 %1218, %v1156
      %v1220 = vpop.permute.xlu0 %1219
      %v1222 = vmul.f32 %v1131, %v1160
      %v1223 = vmul.f32 %v1132, %v1165
      %v1224 = vmul.f32 %v1133, %v1170
      %v1225 = vmul.f32 %v1134, %v1175
      %v1226 = vmul.f32 %v1135, %v1180
      %v1227 = vmul.f32 %v1136, %v1185
      %v1228 = vmul.f32 %v1137, %v1190
      %v1229 = vmul.f32 %v1138, %v1195
      %v1230 = vmul.f32 %v1139, %v1200
      %v1231 = vmul.f32 %v1140, %v1205
      %v1232 = vmul.f32 %v1141, %v1210
      %v1233 = vmul.f32 %v1142, %v1215
      %v1234 = vmul.f32 %v1143, %v1220
      %1235 = vst.msk [vmem:[#allocation2] sm:$0xff] %vm357, 0.0
      %1236 = vst.msk [vmem:[#allocation2 + $0x8] sm:$0xff] %vm357, 0.0
      %1237 = vst.msk [vmem:[#allocation2 + $0x74] sm:$0xff] %vm357, 0.0
      %1238 = vst.msk [vmem:[#allocation2 + $0x7c] sm:$0xff] %vm357, 0.0
      %1239 = vst.msk [vmem:[#allocation2 + $0x10] sm:$0xff] %vm357, %v1222
      %1240 = vst.msk [vmem:[#allocation2 + $0x18] sm:$0xff] %vm357, %v1223
      %1241 = vst.msk [vmem:[#allocation2 + $0x20] sm:$0xff] %vm357, %v1224
      %1242 = vst.msk [vmem:[#allocation2 + $0x28] sm:$0xff] %vm357, %v1225
      %1243 = vst.msk [vmem:[#allocation2 + $0x30] sm:$0xff] %vm357, %v1226
      %1244 = vst.msk [vmem:[#allocation2 + $0x38] sm:$0xff] %vm357, %v1227
      %1245 = vst.msk [vmem:[#allocation2 + $0x40] sm:$0xff] %vm357, %v1228
      %1246 = vst.msk [vmem:[#allocation2 + $0x48] sm:$0xff] %vm357, %v1229
      %1247 = vst.msk [vmem:[#allocation2 + $0x50] sm:$0xff] %vm357, %v1230
      %1248 = vst.msk [vmem:[#allocation2 + $0x58] sm:$0xff] %vm357, %v1231
      %1249 = vst.msk [vmem:[#allocation2 + $0x60] sm:$0xff] %vm357, %v1232
      %1250 = vst.msk [vmem:[#allocation2 + $0x68] sm:$0xff] %vm357, %v1233
      %vm1251 = vcmask 519168
      %1252 = vst.msk [vmem:[#allocation2 + $0x70] sm:$0xf] %vm1251, %v1234
      %v1253 = vld [vmem:[#allocation2 + $0x5] sm:$0xff]
      %v1254 = vld [vmem:[#allocation2 + $0xd] sm:$0xff]
      %v1255 = vld [vmem:[#allocation2 + $0x15] sm:$0xff]
      %v1256 = vld [vmem:[#allocation2 + $0x1d] sm:$0xff]
      %v1257 = vld [vmem:[#allocation2 + $0x25] sm:$0xff]
      %v1258 = vld [vmem:[#allocation2 + $0x2d] sm:$0xff]
      %v1259 = vld [vmem:[#allocation2 + $0x35] sm:$0xff]
      %v1260 = vld [vmem:[#allocation2 + $0x3d] sm:$0xff]
      %v1261 = vld [vmem:[#allocation2 + $0x45] sm:$0xff]
      %v1262 = vld [vmem:[#allocation2 + $0x4d] sm:$0xff]
      %v1263 = vld [vmem:[#allocation2 + $0x55] sm:$0xff]
      %v1264 = vld [vmem:[#allocation2 + $0x5d] sm:$0xff]
      %v1265 = vld [vmem:[#allocation2 + $0x65] sm:$0xff]
      %v1266 = vld [vmem:[#allocation2 + $0x6d] sm:$0xff]
      %v1267 = vld [vmem:[#allocation2 + $0x75] sm:$0xff]
      %v1268 = vld [vmem:[#allocation2 + $0x6] sm:$0xff]
      %v1269 = vld [vmem:[#allocation2 + $0xe] sm:$0xff]
      %v1270 = vld [vmem:[#allocation2 + $0x16] sm:$0xff]
      %v1271 = vld [vmem:[#allocation2 + $0x1e] sm:$0xff]
      %v1272 = vld [vmem:[#allocation2 + $0x26] sm:$0xff]
      %v1273 = vld [vmem:[#allocation2 + $0x2e] sm:$0xff]
      %v1274 = vld [vmem:[#allocation2 + $0x36] sm:$0xff]
      %v1275 = vld [vmem:[#allocation2 + $0x3e] sm:$0xff]
      %v1276 = vld [vmem:[#allocation2 + $0x46] sm:$0xff]
      %v1277 = vld [vmem:[#allocation2 + $0x4e] sm:$0xff]
      %v1278 = vld [vmem:[#allocation2 + $0x56] sm:$0xff]
      %v1279 = vld [vmem:[#allocation2 + $0x5e] sm:$0xff]
      %v1280 = vld [vmem:[#allocation2 + $0x66] sm:$0xff]
      %v1281 = vld [vmem:[#allocation2 + $0x6e] sm:$0xff]
      %v1282 = vld [vmem:[#allocation2 + $0x76] sm:$0xff]
      %v1283 = vld [vmem:[#allocation2 + $0x7] sm:$0xff]
      %v1284 = vld [vmem:[#allocation2 + $0xf] sm:$0xff]
      %v1285 = vld [vmem:[#allocation2 + $0x17] sm:$0xff]
      %v1286 = vld [vmem:[#allocation2 + $0x1f] sm:$0xff]
      %v1287 = vld [vmem:[#allocation2 + $0x27] sm:$0xff]
      %v1288 = vld [vmem:[#allocation2 + $0x2f] sm:$0xff]
      %v1289 = vld [vmem:[#allocation2 + $0x37] sm:$0xff]
      %v1290 = vld [vmem:[#allocation2 + $0x3f] sm:$0xff]
      %v1291 = vld [vmem:[#allocation2 + $0x47] sm:$0xff]
      %v1292 = vld [vmem:[#allocation2 + $0x4f] sm:$0xff]
      %v1293 = vld [vmem:[#allocation2 + $0x57] sm:$0xff]
      %v1294 = vld [vmem:[#allocation2 + $0x5f] sm:$0xff]
      %v1295 = vld [vmem:[#allocation2 + $0x67] sm:$0xff]
      %v1296 = vld [vmem:[#allocation2 + $0x6f] sm:$0xff]
      %v1297 = vld [vmem:[#allocation2 + $0x77] sm:$0xff]
      %1313 = vrot.lane.b32.xlu0 %v1268, 64
      %v1314 = vpop.permute.xlu0 %1313
      %1315 = vrot.lane.b32.xlu0 %v1269, 64
      %v1316 = vpop.permute.xlu0 %1315
      %1317 = vrot.lane.b32.xlu0 %v1270, 64
      %v1318 = vpop.permute.xlu0 %1317
      %1319 = vrot.lane.b32.xlu0 %v1271, 64
      %v1320 = vpop.permute.xlu0 %1319
      %1321 = vrot.lane.b32.xlu0 %v1272, 64
      %v1322 = vpop.permute.xlu0 %1321
      %1323 = vrot.lane.b32.xlu0 %v1273, 64
      %v1324 = vpop.permute.xlu0 %1323
      %1325 = vrot.lane.b32.xlu0 %v1274, 64
      %v1326 = vpop.permute.xlu0 %1325
      %1327 = vrot.lane.b32.xlu0 %v1275, 64
      %v1328 = vpop.permute.xlu0 %1327
      %1329 = vrot.lane.b32.xlu0 %v1276, 64
      %v1330 = vpop.permute.xlu0 %1329
      %1331 = vrot.lane.b32.xlu0 %v1277, 64
      %v1332 = vpop.permute.xlu0 %1331
      %1333 = vrot.lane.b32.xlu0 %v1278, 64
      %v1334 = vpop.permute.xlu0 %1333
      %1335 = vrot.lane.b32.xlu0 %v1279, 64
      %v1336 = vpop.permute.xlu0 %1335
      %1337 = vrot.lane.b32.xlu0 %v1280, 64
      %v1338 = vpop.permute.xlu0 %1337
      %1339 = vrot.lane.b32.xlu0 %v1281, 64
      %v1340 = vpop.permute.xlu0 %1339
      %1341 = vrot.lane.b32.xlu0 %v1282, 64
      %v1342 = vpop.permute.xlu0 %1341
      %v1358 = vsel %vm357, %v1253, %v1314
      %v1359 = vsel %vm357, %v1254, %v1316
      %v1360 = vsel %vm357, %v1255, %v1318
      %v1361 = vsel %vm357, %v1256, %v1320
      %v1362 = vsel %vm357, %v1257, %v1322
      %v1363 = vsel %vm357, %v1258, %v1324
      %v1364 = vsel %vm357, %v1259, %v1326
      %v1365 = vsel %vm357, %v1260, %v1328
      %v1366 = vsel %vm357, %v1261, %v1330
      %v1367 = vsel %vm357, %v1262, %v1332
      %v1368 = vsel %vm357, %v1263, %v1334
      %v1369 = vsel %vm357, %v1264, %v1336
      %v1370 = vsel %vm357, %v1265, %v1338
      %v1371 = vsel %vm357, %v1266, %v1340
      %v1372 = vsel %vm357, %v1267, %v1342
      %v1373 = vld [vmem:[%s4] sm:$0xff]
      %v1374 = vld [vmem:[%s4 + $0x8] sm:$0xff]
      %v1375 = vld [vmem:[%s4 + $0x10] sm:$0xff]
      %v1376 = vld [vmem:[%s4 + $0x18] sm:$0xff]
      %v1377 = vld [vmem:[%s4 + $0x20] sm:$0xff]
      %v1378 = vld [vmem:[%s4 + $0x28] sm:$0xff]
      %v1379 = vld [vmem:[%s4 + $0x30] sm:$0xff]
      %v1380 = vld [vmem:[%s4 + $0x38] sm:$0xff]
      %v1381 = vld [vmem:[%s4 + $0x40] sm:$0xff]
      %v1382 = vld [vmem:[%s4 + $0x48] sm:$0xff]
      %v1383 = vld [vmem:[%s4 + $0x50] sm:$0xff]
      %v1384 = vld [vmem:[%s4 + $0x58] sm:$0xff]
      %v1385 = vld [vmem:[%s4 + $0x60] sm:$0xff]
      %v1386 = vld [vmem:[%s4 + $0x68] sm:$0xff]
      %v1387 = vld [vmem:[%s4 + $0x70] sm:$0xff]
      %v1388 = vld [vmem:[%s4 + $0x78] sm:$0xff]
      %v1389 = vld [vmem:[%s4 + $0x80] sm:$0xff]
      %v1390 = vld [vmem:[%s4 + $0x88] sm:$0xff]
      %v1391 = vld [vmem:[%s4 + $0x90] sm:$0xff]
      %v1392 = vld [vmem:[%s4 + $0x98] sm:$0xff]
      %v1393 = vld [vmem:[%s4 + $0xa0] sm:$0xff]
      %v1394 = vld [vmem:[%s4 + $0xa8] sm:$0xff]
      %v1395 = vld [vmem:[%s4 + $0xb0] sm:$0xff]
      %v1396 = vld [vmem:[%s4 + $0xb8] sm:$0xff]
      %s1397 = scalar_lea.vmem %s4, 192
      %v1398 = vld [vmem:[%s1397] sm:$0xff]
      %v1399 = vld [vmem:[%s1397 + $0x8] sm:$0xff]
      %v1400 = vld [vmem:[%s1397 + $0x10] sm:$0xff]
      %v1401 = vld [vmem:[%s1397 + $0x18] sm:$0xff]
      %v1402 = vld [vmem:[%s1397 + $0x20] sm:$0xff]
      %v1403 = vld [vmem:[%s1397 + $0x28] sm:$0xff]
      %v1404 = vld [vmem:[%s1397 + $0x30] sm:$0xff]
      %v1405 = vld [vmem:[%s1397 + $0x38] sm:$0xff]
      %v1406 = vld [vmem:[%s1397 + $0x40] sm:$0xff]
      %v1407 = vld [vmem:[%s1397 + $0x48] sm:$0xff]
      %v1408 = vld [vmem:[%s1397 + $0x50] sm:$0xff]
      %v1409 = vld [vmem:[%s1397 + $0x58] sm:$0xff]
      %v1410 = vld [vmem:[%s1397 + $0x60] sm:$0xff]
      %v1411 = vld [vmem:[%s1397 + $0x68] sm:$0xff]
      %v1412 = vld [vmem:[%s1397 + $0x70] sm:$0xff]
      %v1413 = vld [vmem:[%s1397 + $0x78] sm:$0xff]
      %v1414 = vld [vmem:[%s1397 + $0x80] sm:$0xff]
      %v1415 = vld [vmem:[%s1397 + $0x88] sm:$0xff]
      %v1416 = vld [vmem:[%s1397 + $0x90] sm:$0xff]
      %v1417 = vld [vmem:[%s1397 + $0x98] sm:$0xff]
      %v1418 = vld [vmem:[%s1397 + $0xa0] sm:$0xff]
      %v1419 = vld [vmem:[%s1397 + $0xa8] sm:$0xff]
      %v1420 = vld [vmem:[%s1397 + $0xb0] sm:$0xff]
      %v1421 = vld [vmem:[%s1397 + $0xb8] sm:$0xff]
      %v1448 = vrot.slane %v1359, 2
      %v1449 = vrot.slane %v1360, 2
      %v1450 = vsel %vm448, %v1448, %v1449
      %v1451 = vrot.slane %v1284, 2
      %v1452 = vrot.slane %v1285, 2
      %v1453 = vsel %vm448, %v1451, %v1452
      %v1454 = vrot.slane %v1361, 2
      %v1455 = vsel %vm448, %v1449, %v1454
      %v1456 = vrot.slane %v1286, 2
      %v1457 = vsel %vm448, %v1452, %v1456
      %v1458 = vrot.slane %v1362, 2
      %v1459 = vsel %vm448, %v1454, %v1458
      %v1460 = vrot.slane %v1287, 2
      %v1461 = vsel %vm448, %v1456, %v1460
      %v1462 = vrot.slane %v1363, 2
      %v1463 = vsel %vm448, %v1458, %v1462
      %v1464 = vrot.slane %v1288, 2
      %v1465 = vsel %vm448, %v1460, %v1464
      %v1466 = vrot.slane %v1364, 2
      %v1467 = vsel %vm448, %v1462, %v1466
      %v1468 = vrot.slane %v1289, 2
      %v1469 = vsel %vm448, %v1464, %v1468
      %v1470 = vrot.slane %v1365, 2
      %v1471 = vsel %vm448, %v1466, %v1470
      %v1472 = vrot.slane %v1290, 2
      %v1473 = vsel %vm448, %v1468, %v1472
      %v1474 = vrot.slane %v1366, 2
      %v1475 = vsel %vm448, %v1470, %v1474
      %v1476 = vrot.slane %v1291, 2
      %v1477 = vsel %vm448, %v1472, %v1476
      %v1478 = vrot.slane %v1367, 2
      %v1479 = vsel %vm448, %v1474, %v1478
      %v1480 = vrot.slane %v1292, 2
      %v1481 = vsel %vm448, %v1476, %v1480
      %v1482 = vrot.slane %v1368, 2
      %v1483 = vsel %vm448, %v1478, %v1482
      %v1484 = vrot.slane %v1293, 2
      %v1485 = vsel %vm448, %v1480, %v1484
      %v1486 = vrot.slane %v1369, 2
      %v1487 = vsel %vm448, %v1482, %v1486
      %v1488 = vrot.slane %v1294, 2
      %v1489 = vsel %vm448, %v1484, %v1488
      %v1490 = vrot.slane %v1370, 2
      %v1491 = vsel %vm448, %v1486, %v1490
      %v1492 = vrot.slane %v1295, 2
      %v1493 = vsel %vm448, %v1488, %v1492
      %v1494 = vrot.slane %v1371, 2
      %v1495 = vsel %vm448, %v1490, %v1494
      %v1496 = vrot.slane %v1296, 2
      %v1497 = vsel %vm448, %v1492, %v1496
      %v1511 = vsel %vm357, %v1453, 0
      %v1513 = vsel %vm357, %v1457, 0
      %v1515 = vsel %vm357, %v1461, 0
      %v1517 = vsel %vm357, %v1465, 0
      %v1519 = vsel %vm357, %v1469, 0
      %v1521 = vsel %vm357, %v1473, 0
      %v1523 = vsel %vm357, %v1477, 0
      %v1525 = vsel %vm357, %v1481, 0
      %v1527 = vsel %vm357, %v1485, 0
      %v1529 = vsel %vm357, %v1489, 0
      %v1531 = vsel %vm357, %v1493, 0
      %v1533 = vsel %vm357, %v1497, 0
      %v1535 = vsel %vm357, %v1496, 0
      %1537 = vmatprep.subr.mxu0 0.0
      %1538 = vmatpush1.msra.mxu0 %v1398
      %1539 = vmatprep.subr.mxu0 0.0
      %1540 = vmatpush1.msra.mxu0 %v1399
      %1541 = vmatprep.subr.mxu0 0.0
      %1542 = vmatpush1.msra.mxu0 %v1400
      %1543 = vmatprep.subr.mxu0 0.0
      %1544 = vmatpush1.msra.mxu0 %v1401
      %1545 = vmatprep.subr.mxu0 0.0
      %1546 = vmatpush1.msra.mxu0 %v1402
      %1547 = vmatprep.subr.mxu0 0.0
      %1548 = vmatpush1.msra.mxu0 %v1403
      %1549 = vmatprep.subr.mxu0 0.0
      %1550 = vmatpush1.msra.mxu0 %v1404
      %1551 = vmatprep.subr.mxu0 0.0
      %1552 = vmatpush1.msra.mxu0 %v1405
      %1553 = vmatprep.subr.mxu0 0.0
      %1554 = vmatpush1.msra.mxu0 %v1406
      %1555 = vmatprep.subr.mxu0 0.0
      %1556 = vmatpush1.msra.mxu0 %v1407
      %1557 = vmatprep.subr.mxu0 0.0
      %1558 = vmatpush1.msra.mxu0 %v1408
      %1559 = vmatprep.subr.mxu0 0.0
      %1560 = vmatpush1.msra.mxu0 %v1409
      %1561 = vmatprep.subr.mxu0 0.0
      %1562 = vmatpush1.msra.mxu0 %v1410
      %1563 = vmatprep.subr.mxu0 0.0
      %1564 = vmatpush1.msra.mxu0 %v1411
      %1565 = vmatprep.subr.mxu0 0.0
      %1566 = vmatpush1.msra.mxu0 %v1412
      %1567 = vmatprep.subr.mxu0 0.0
      %1568 = vmatpush1.msra.mxu0 %v1413
      %1569 = vmatprep.subr.mxu0 0.0
      %1570 = vmatpush1.msra.mxu0 %v1414
      %1571 = vmatprep.subr.mxu0 0.0
      %1572 = vmatpush1.msra.mxu0 %v1415
      %1573 = vmatprep.subr.mxu0 0.0
      %1574 = vmatpush1.msra.mxu0 %v1416
      %1575 = vmatprep.subr.mxu0 0.0
      %1576 = vmatpush1.msra.mxu0 %v1417
      %1577 = vmatprep.subr.mxu0 0.0
      %1578 = vmatpush1.msra.mxu0 %v1418
      %1579 = vmatprep.subr.mxu0 0.0
      %1580 = vmatpush1.msra.mxu0 %v1419
      %1581 = vmatprep.subr.mxu0 0.0
      %1582 = vmatpush1.msra.mxu0 %v1420
      %1583 = vmatprep.subr.mxu0 0.0
      %1584 = vmatpush1.msra.mxu0 %v1421
      %1585 = vmatprep.subr.mxu0 0.0
      %1586 = vmatpush1.msra.mxu0 0.0
      %1587 = vmatprep.subr.mxu0 0.0
      %1588 = vmatpush1.msra.mxu0 0.0
      %1589 = vmatprep.subr.mxu0 0.0
      %1590 = vmatpush1.msra.mxu0 0.0
      %1591 = vmatprep.subr.mxu0 0.0
      %1592 = vmatpush1.msra.mxu0 0.0
      %1593 = vmatprep.subr.mxu0 0.0
      %1594 = vmatpush1.msra.mxu0 0.0
      %1595 = vmatprep.subr.mxu0 0.0
      %1596 = vmatpush1.msra.mxu0 0.0
      %1597 = vmatprep.subr.mxu0 0.0
      %1598 = vmatpush1.msra.mxu0 0.0
      %1599 = vmatprep.subr.mxu0 0.0
      %1600 = vmatpush1.msra.mxu0 0.0
      %1601 = vmatprep.mubr.f32.mxu0 %v1511
      %1602 = vmatmul.mubr.f32.gmra.mrb[0].mxu0 %v1450
      %v1603 = vpop.f32.mrb[0].mxu0
      %v1604 = vadd.f32 0.0, %v1603
      %v1605 = vpop.f32.mrb[0].mxu0
      %1606 = vmatprep.mubr.f32.mxu0 %v1513
      %1607 = vmatmul.mubr.f32.gmra.mrb[0].mxu0 %v1455
      %v1608 = vpop.f32.mrb[0].mxu0
      %v1609 = vadd.f32 0.0, %v1608
      %v1610 = vpop.f32.mrb[0].mxu0
      %1611 = vmatprep.mubr.f32.mxu0 %v1515
      %1612 = vmatmul.mubr.f32.gmra.mrb[0].mxu0 %v1459
      %v1613 = vpop.f32.mrb[0].mxu0
      %v1614 = vadd.f32 0.0, %v1613
      %v1615 = vpop.f32.mrb[0].mxu0
      %1616 = vmatprep.mubr.f32.mxu0 %v1517
      %1617 = vmatmul.mubr.f32.gmra.mrb[0].mxu0 %v1463
      %v1618 = vpop.f32.mrb[0].mxu0
      %v1619 = vadd.f32 0.0, %v1618
      %v1620 = vpop.f32.mrb[0].mxu0
      %1621 = vmatprep.mubr.f32.mxu0 %v1519
      %1622 = vmatmul.mubr.f32.gmra.mrb[0].mxu0 %v1467
      %v1623 = vpop.f32.mrb[0].mxu0
      %v1624 = vadd.f32 0.0, %v1623
      %v1625 = vpop.f32.mrb[0].mxu0
      %1626 = vmatprep.mubr.f32.mxu0 %v1521
      %1627 = vmatmul.mubr.f32.gmra.mrb[0].mxu0 %v1471
      %v1628 = vpop.f32.mrb[0].mxu0
      %v1629 = vadd.f32 0.0, %v1628
      %v1630 = vpop.f32.mrb[0].mxu0
      %1631 = vmatprep.mubr.f32.mxu0 %v1523
      %1632 = vmatmul.mubr.f32.gmra.mrb[0].mxu0 %v1475
      %v1633 = vpop.f32.mrb[0].mxu0
      %v1634 = vadd.f32 0.0, %v1633
      %v1635 = vpop.f32.mrb[0].mxu0
      %1636 = vmatprep.mubr.f32.mxu0 %v1525
      %1637 = vmatmul.mubr.f32.gmra.mrb[0].mxu0 %v1479
      %v1638 = vpop.f32.mrb[0].mxu0
      %v1639 = vadd.f32 0.0, %v1638
      %v1640 = vpop.f32.mrb[0].mxu0
      %1641 = vmatprep.mubr.f32.mxu0 %v1527
      %1642 = vmatmul.mubr.f32.gmra.mrb[0].mxu0 %v1483
      %v1643 = vpop.f32.mrb[0].mxu0
      %v1644 = vadd.f32 0.0, %v1643
      %v1645 = vpop.f32.mrb[0].mxu0
      %1646 = vmatprep.mubr.f32.mxu0 %v1529
      %1647 = vmatmul.mubr.f32.gmra.mrb[0].mxu0 %v1487
      %v1648 = vpop.f32.mrb[0].mxu0
      %v1649 = vadd.f32 0.0, %v1648
      %v1650 = vpop.f32.mrb[0].mxu0
      %1651 = vmatprep.mubr.f32.mxu0 %v1531
      %1652 = vmatmul.mubr.f32.gmra.mrb[0].mxu0 %v1491
      %v1653 = vpop.f32.mrb[0].mxu0
      %v1654 = vadd.f32 0.0, %v1653
      %v1655 = vpop.f32.mrb[0].mxu0
      %1656 = vmatprep.mubr.f32.mxu0 %v1533
      %1657 = vmatmul.mubr.f32.gmra.mrb[0].mxu0 %v1495
      %v1658 = vpop.f32.mrb[0].mxu0
      %v1659 = vadd.f32 0.0, %v1658
      %v1660 = vpop.f32.mrb[0].mxu0
      %1661 = vmatprep.mubr.f32.mxu0 %v1535
      %1662 = vmatmul.mubr.f32.gmra.mrb[0].mxu0 %v1494
      %v1663 = vpop.f32.mrb[0].mxu0
      %v1664 = vadd.f32 0.0, %v1663
      %v1665 = vpop.f32.mrb[0].mxu0
      %1666 = vdwg.mxu0
      %v1668 = vsel %vm357, %v1283, 0
      %v1670 = vsel %vm357, %v1284, 0
      %v1672 = vsel %vm357, %v1285, 0
      %v1674 = vsel %vm357, %v1286, 0
      %v1676 = vsel %vm357, %v1287, 0
      %v1678 = vsel %vm357, %v1288, 0
      %v1680 = vsel %vm357, %v1289, 0
      %v1682 = vsel %vm357, %v1290, 0
      %v1684 = vsel %vm357, %v1291, 0
      %v1686 = vsel %vm357, %v1292, 0
      %v1688 = vsel %vm357, %v1293, 0
      %v1690 = vsel %vm357, %v1294, 0
      %v1692 = vsel %vm357, %v1295, 0
      %1694 = vmatprep.subr.mxu0 0.0
      %1695 = vmatpush1.msra.mxu0 %v1373
      %1696 = vmatprep.subr.mxu0 0.0
      %1697 = vmatpush1.msra.mxu0 %v1374
      %1698 = vmatprep.subr.mxu0 0.0
      %1699 = vmatpush1.msra.mxu0 %v1375
      %1700 = vmatprep.subr.mxu0 0.0
      %1701 = vmatpush1.msra.mxu0 %v1376
      %1702 = vmatprep.subr.mxu0 0.0
      %1703 = vmatpush1.msra.mxu0 %v1377
      %1704 = vmatprep.subr.mxu0 0.0
      %1705 = vmatpush1.msra.mxu0 %v1378
      %1706 = vmatprep.subr.mxu0 0.0
      %1707 = vmatpush1.msra.mxu0 %v1379
      %1708 = vmatprep.subr.mxu0 0.0
      %1709 = vmatpush1.msra.mxu0 %v1380
      %1710 = vmatprep.subr.mxu0 0.0
      %1711 = vmatpush1.msra.mxu0 %v1381
      %1712 = vmatprep.subr.mxu0 0.0
      %1713 = vmatpush1.msra.mxu0 %v1382
      %1714 = vmatprep.subr.mxu0 0.0
      %1715 = vmatpush1.msra.mxu0 %v1383
      %1716 = vmatprep.subr.mxu0 0.0
      %1717 = vmatpush1.msra.mxu0 %v1384
      %1718 = vmatprep.subr.mxu0 0.0
      %1719 = vmatpush1.msra.mxu0 %v1385
      %1720 = vmatprep.subr.mxu0 0.0
      %1721 = vmatpush1.msra.mxu0 %v1386
      %1722 = vmatprep.subr.mxu0 0.0
      %1723 = vmatpush1.msra.mxu0 %v1387
      %1724 = vmatprep.subr.mxu0 0.0
      %1725 = vmatpush1.msra.mxu0 %v1388
      %1726 = vmatprep.subr.mxu0 0.0
      %1727 = vmatpush1.msra.mxu0 %v1389
      %1728 = vmatprep.subr.mxu0 0.0
      %1729 = vmatpush1.msra.mxu0 %v1390
      %1730 = vmatprep.subr.mxu0 0.0
      %1731 = vmatpush1.msra.mxu0 %v1391
      %1732 = vmatprep.subr.mxu0 0.0
      %1733 = vmatpush1.msra.mxu0 %v1392
      %1734 = vmatprep.subr.mxu0 0.0
      %1735 = vmatpush1.msra.mxu0 %v1393
      %1736 = vmatprep.subr.mxu0 0.0
      %1737 = vmatpush1.msra.mxu0 %v1394
      %1738 = vmatprep.subr.mxu0 0.0
      %1739 = vmatpush1.msra.mxu0 %v1395
      %1740 = vmatprep.subr.mxu0 0.0
      %1741 = vmatpush1.msra.mxu0 %v1396
      %1742 = vmatprep.subr.mxu0 0.0
      %1743 = vmatpush1.msra.mxu0 0.0
      %1744 = vmatprep.subr.mxu0 0.0
      %1745 = vmatpush1.msra.mxu0 0.0
      %1746 = vmatprep.subr.mxu0 0.0
      %1747 = vmatpush1.msra.mxu0 0.0
      %1748 = vmatprep.subr.mxu0 0.0
      %1749 = vmatpush1.msra.mxu0 0.0
      %1750 = vmatprep.subr.mxu0 0.0
      %1751 = vmatpush1.msra.mxu0 0.0
      %1752 = vmatprep.subr.mxu0 0.0
      %1753 = vmatpush1.msra.mxu0 0.0
      %1754 = vmatprep.subr.mxu0 0.0
      %1755 = vmatpush1.msra.mxu0 0.0
      %1756 = vmatprep.subr.mxu0 0.0
      %1757 = vmatpush1.msra.mxu0 0.0
      %1758 = vmatprep.mubr.f32.mxu0 %v1668
      %1759 = vmatmul.mubr.f32.gmra.mrb[0].mxu0 %v1358
      %v1760 = vpop.f32.mrb[0].mxu0
      %v1761 = vadd.f32 %v1604, %v1760
      %v1762 = vpop.f32.mrb[0].mxu0
      %1763 = vmatprep.mubr.f32.mxu0 %v1670
      %1764 = vmatmul.mubr.f32.gmra.mrb[0].mxu0 %v1359
      %v1765 = vpop.f32.mrb[0].mxu0
      %v1766 = vadd.f32 %v1609, %v1765
      %v1767 = vpop.f32.mrb[0].mxu0
      %1768 = vmatprep.mubr.f32.mxu0 %v1672
      %1769 = vmatmul.mubr.f32.gmra.mrb[0].mxu0 %v1360
      %v1770 = vpop.f32.mrb[0].mxu0
      %v1771 = vadd.f32 %v1614, %v1770
      %v1772 = vpop.f32.mrb[0].mxu0
      %1773 = vmatprep.mubr.f32.mxu0 %v1674
      %1774 = vmatmul.mubr.f32.gmra.mrb[0].mxu0 %v1361
      %v1775 = vpop.f32.mrb[0].mxu0
      %v1776 = vadd.f32 %v1619, %v1775
      %v1777 = vpop.f32.mrb[0].mxu0
      %1778 = vmatprep.mubr.f32.mxu0 %v1676
      %1779 = vmatmul.mubr.f32.gmra.mrb[0].mxu0 %v1362
      %v1780 = vpop.f32.mrb[0].mxu0
      %v1781 = vadd.f32 %v1624, %v1780
      %v1782 = vpop.f32.mrb[0].mxu0
      %1783 = vmatprep.mubr.f32.mxu0 %v1678
      %1784 = vmatmul.mubr.f32.gmra.mrb[0].mxu0 %v1363
      %v1785 = vpop.f32.mrb[0].mxu0
      %v1786 = vadd.f32 %v1629, %v1785
      %v1787 = vpop.f32.mrb[0].mxu0
      %1788 = vmatprep.mubr.f32.mxu0 %v1680
      %1789 = vmatmul.mubr.f32.gmra.mrb[0].mxu0 %v1364
      %v1790 = vpop.f32.mrb[0].mxu0
      %v1791 = vadd.f32 %v1634, %v1790
      %v1792 = vpop.f32.mrb[0].mxu0
      %1793 = vmatprep.mubr.f32.mxu0 %v1682
      %1794 = vmatmul.mubr.f32.gmra.mrb[0].mxu0 %v1365
      %v1795 = vpop.f32.mrb[0].mxu0
      %v1796 = vadd.f32 %v1639, %v1795
      %v1797 = vpop.f32.mrb[0].mxu0
      %1798 = vmatprep.mubr.f32.mxu0 %v1684
      %1799 = vmatmul.mubr.f32.gmra.mrb[0].mxu0 %v1366
      %v1800 = vpop.f32.mrb[0].mxu0
      %v1801 = vadd.f32 %v1644, %v1800
      %v1802 = vpop.f32.mrb[0].mxu0
      %1803 = vmatprep.mubr.f32.mxu0 %v1686
      %1804 = vmatmul.mubr.f32.gmra.mrb[0].mxu0 %v1367
      %v1805 = vpop.f32.mrb[0].mxu0
      %v1806 = vadd.f32 %v1649, %v1805
      %v1807 = vpop.f32.mrb[0].mxu0
      %1808 = vmatprep.mubr.f32.mxu0 %v1688
      %1809 = vmatmul.mubr.f32.gmra.mrb[0].mxu0 %v1368
      %v1810 = vpop.f32.mrb[0].mxu0
      %v1811 = vadd.f32 %v1654, %v1810
      %v1812 = vpop.f32.mrb[0].mxu0
      %1813 = vmatprep.mubr.f32.mxu0 %v1690
      %1814 = vmatmul.mubr.f32.gmra.mrb[0].mxu0 %v1369
      %v1815 = vpop.f32.mrb[0].mxu0
      %v1816 = vadd.f32 %v1659, %v1815
      %v1817 = vpop.f32.mrb[0].mxu0
      %1818 = vmatprep.mubr.f32.mxu0 %v1692
      %1819 = vmatmul.mubr.f32.gmra.mrb[0].mxu0 %v1370
      %v1820 = vpop.f32.mrb[0].mxu0
      %v1821 = vadd.f32 %v1664, %v1820
      %v1822 = vpop.f32.mrb[0].mxu0
      %1823 = vdwg.mxu0
      %s1824 = scalar_lea.vmem %s4, 384
      %v1825 = vld [vmem:[%s1824] sm:$0xff]
      %v1826 = vld [vmem:[%s1824 + $0x8] sm:$0xff]
      %v1827 = vld [vmem:[%s1824 + $0x10] sm:$0xff]
      %v1828 = vld [vmem:[%s1824 + $0x18] sm:$0xff]
      %v1829 = vld [vmem:[%s1824 + $0x20] sm:$0xff]
      %v1830 = vld [vmem:[%s1824 + $0x28] sm:$0xff]
      %v1831 = vld [vmem:[%s1824 + $0x30] sm:$0xff]
      %v1832 = vld [vmem:[%s1824 + $0x38] sm:$0xff]
      %v1833 = vld [vmem:[%s1824 + $0x40] sm:$0xff]
      %v1834 = vld [vmem:[%s1824 + $0x48] sm:$0xff]
      %v1835 = vld [vmem:[%s1824 + $0x50] sm:$0xff]
      %v1836 = vld [vmem:[%s1824 + $0x58] sm:$0xff]
      %v1837 = vld [vmem:[%s1824 + $0x60] sm:$0xff]
      %v1838 = vld [vmem:[%s1824 + $0x68] sm:$0xff]
      %v1839 = vld [vmem:[%s1824 + $0x70] sm:$0xff]
      %v1840 = vld [vmem:[%s1824 + $0x78] sm:$0xff]
      %v1841 = vld [vmem:[%s1824 + $0x80] sm:$0xff]
      %v1842 = vld [vmem:[%s1824 + $0x88] sm:$0xff]
      %v1843 = vld [vmem:[%s1824 + $0x90] sm:$0xff]
      %v1844 = vld [vmem:[%s1824 + $0x98] sm:$0xff]
      %v1845 = vld [vmem:[%s1824 + $0xa0] sm:$0xff]
      %v1846 = vld [vmem:[%s1824 + $0xa8] sm:$0xff]
      %v1847 = vld [vmem:[%s1824 + $0xb0] sm:$0xff]
      %v1848 = vld [vmem:[%s1824 + $0xb8] sm:$0xff]
      %v1851 = vrot.slane %v1360, 4
      %v1852 = vrot.slane %v1361, 4
      %v1853 = vsel %vm852, %v1851, %v1852
      %v1854 = vrot.slane %v1285, 4
      %v1855 = vrot.slane %v1286, 4
      %v1856 = vsel %vm852, %v1854, %v1855
      %v1857 = vrot.slane %v1362, 4
      %v1858 = vsel %vm852, %v1852, %v1857
      %v1859 = vrot.slane %v1287, 4
      %v1860 = vsel %vm852, %v1855, %v1859
      %v1861 = vrot.slane %v1363, 4
      %v1862 = vsel %vm852, %v1857, %v1861
      %v1863 = vrot.slane %v1288, 4
      %v1864 = vsel %vm852, %v1859, %v1863
      %v1865 = vrot.slane %v1364, 4
      %v1866 = vsel %vm852, %v1861, %v1865
      %v1867 = vrot.slane %v1289, 4
      %v1868 = vsel %vm852, %v1863, %v1867
      %v1869 = vrot.slane %v1365, 4
      %v1870 = vsel %vm852, %v1865, %v1869
      %v1871 = vrot.slane %v1290, 4
      %v1872 = vsel %vm852, %v1867, %v1871
      %v1873 = vrot.slane %v1366, 4
      %v1874 = vsel %vm852, %v1869, %v1873
      %v1875 = vrot.slane %v1291, 4
      %v1876 = vsel %vm852, %v1871, %v1875
      %v1877 = vrot.slane %v1367, 4
      %v1878 = vsel %vm852, %v1873, %v1877
      %v1879 = vrot.slane %v1292, 4
      %v1880 = vsel %vm852, %v1875, %v1879
      %v1881 = vrot.slane %v1368, 4
      %v1882 = vsel %vm852, %v1877, %v1881
      %v1883 = vrot.slane %v1293, 4
      %v1884 = vsel %vm852, %v1879, %v1883
      %v1885 = vrot.slane %v1369, 4
      %v1886 = vsel %vm852, %v1881, %v1885
      %v1887 = vrot.slane %v1294, 4
      %v1888 = vsel %vm852, %v1883, %v1887
      %v1889 = vrot.slane %v1370, 4
      %v1890 = vsel %vm852, %v1885, %v1889
      %v1891 = vrot.slane %v1295, 4
      %v1892 = vsel %vm852, %v1887, %v1891
      %v1893 = vrot.slane %v1371, 4
      %v1894 = vsel %vm852, %v1889, %v1893
      %v1895 = vrot.slane %v1296, 4
      %v1896 = vsel %vm852, %v1891, %v1895
      %v1897 = vrot.slane %v1372, 4
      %v1898 = vsel %vm852, %v1893, %v1897
      %v1899 = vrot.slane %v1297, 4
      %v1900 = vsel %vm852, %v1895, %v1899
      %v1914 = vsel %vm357, %v1856, 0
      %v1916 = vsel %vm357, %v1860, 0
      %v1918 = vsel %vm357, %v1864, 0
      %v1920 = vsel %vm357, %v1868, 0
      %v1922 = vsel %vm357, %v1872, 0
      %v1924 = vsel %vm357, %v1876, 0
      %v1926 = vsel %vm357, %v1880, 0
      %v1928 = vsel %vm357, %v1884, 0
      %v1930 = vsel %vm357, %v1888, 0
      %v1932 = vsel %vm357, %v1892, 0
      %v1934 = vsel %vm357, %v1896, 0
      %v1936 = vsel %vm357, %v1900, 0
      %v1938 = vsel %vm357, %v1899, 0
      %1940 = vmatprep.subr.mxu0 0.0
      %1941 = vmatpush1.msra.mxu0 %v1825
      %1942 = vmatprep.subr.mxu0 0.0
      %1943 = vmatpush1.msra.mxu0 %v1826
      %1944 = vmatprep.subr.mxu0 0.0
      %1945 = vmatpush1.msra.mxu0 %v1827
      %1946 = vmatprep.subr.mxu0 0.0
      %1947 = vmatpush1.msra.mxu0 %v1828
      %1948 = vmatprep.subr.mxu0 0.0
      %1949 = vmatpush1.msra.mxu0 %v1829
      %1950 = vmatprep.subr.mxu0 0.0
      %1951 = vmatpush1.msra.mxu0 %v1830
      %1952 = vmatprep.subr.mxu0 0.0
      %1953 = vmatpush1.msra.mxu0 %v1831
      %1954 = vmatprep.subr.mxu0 0.0
      %1955 = vmatpush1.msra.mxu0 %v1832
      %1956 = vmatprep.subr.mxu0 0.0
      %1957 = vmatpush1.msra.mxu0 %v1833
      %1958 = vmatprep.subr.mxu0 0.0
      %1959 = vmatpush1.msra.mxu0 %v1834
      %1960 = vmatprep.subr.mxu0 0.0
      %1961 = vmatpush1.msra.mxu0 %v1835
      %1962 = vmatprep.subr.mxu0 0.0
      %1963 = vmatpush1.msra.mxu0 %v1836
      %1964 = vmatprep.subr.mxu0 0.0
      %1965 = vmatpush1.msra.mxu0 %v1837
      %1966 = vmatprep.subr.mxu0 0.0
      %1967 = vmatpush1.msra.mxu0 %v1838
      %1968 = vmatprep.subr.mxu0 0.0
      %1969 = vmatpush1.msra.mxu0 %v1839
      %1970 = vmatprep.subr.mxu0 0.0
      %1971 = vmatpush1.msra.mxu0 %v1840
      %1972 = vmatprep.subr.mxu0 0.0
      %1973 = vmatpush1.msra.mxu0 %v1841
      %1974 = vmatprep.subr.mxu0 0.0
      %1975 = vmatpush1.msra.mxu0 %v1842
      %1976 = vmatprep.subr.mxu0 0.0
      %1977 = vmatpush1.msra.mxu0 %v1843
      %1978 = vmatprep.subr.mxu0 0.0
      %1979 = vmatpush1.msra.mxu0 %v1844
      %1980 = vmatprep.subr.mxu0 0.0
      %1981 = vmatpush1.msra.mxu0 %v1845
      %1982 = vmatprep.subr.mxu0 0.0
      %1983 = vmatpush1.msra.mxu0 %v1846
      %1984 = vmatprep.subr.mxu0 0.0
      %1985 = vmatpush1.msra.mxu0 %v1847
      %1986 = vmatprep.subr.mxu0 0.0
      %1987 = vmatpush1.msra.mxu0 %v1848
      %1988 = vmatprep.subr.mxu0 0.0
      %1989 = vmatpush1.msra.mxu0 0.0
      %1990 = vmatprep.subr.mxu0 0.0
      %1991 = vmatpush1.msra.mxu0 0.0
      %1992 = vmatprep.subr.mxu0 0.0
      %1993 = vmatpush1.msra.mxu0 0.0
      %1994 = vmatprep.subr.mxu0 0.0
      %1995 = vmatpush1.msra.mxu0 0.0
      %1996 = vmatprep.subr.mxu0 0.0
      %1997 = vmatpush1.msra.mxu0 0.0
      %1998 = vmatprep.subr.mxu0 0.0
      %1999 = vmatpush1.msra.mxu0 0.0
      %2000 = vmatprep.subr.mxu0 0.0
      %2001 = vmatpush1.msra.mxu0 0.0
      %2002 = vmatprep.subr.mxu0 0.0
      %2003 = vmatpush1.msra.mxu0 0.0
      %2004 = vmatprep.mubr.f32.mxu0 %v1914
      %2005 = vmatmul.mubr.f32.gmra.mrb[0].mxu0 %v1853
      %v2006 = vpop.f32.mrb[0].mxu0
      %v2007 = vadd.f32 0.0, %v2006
      %v2008 = vpop.f32.mrb[0].mxu0
      %2009 = vmatprep.mubr.f32.mxu0 %v1916
      %2010 = vmatmul.mubr.f32.gmra.mrb[0].mxu0 %v1858
      %v2011 = vpop.f32.mrb[0].mxu0
      %v2012 = vadd.f32 0.0, %v2011
      %v2013 = vpop.f32.mrb[0].mxu0
      %2014 = vmatprep.mubr.f32.mxu0 %v1918
      %2015 = vmatmul.mubr.f32.gmra.mrb[0].mxu0 %v1862
      %v2016 = vpop.f32.mrb[0].mxu0
      %v2017 = vadd.f32 0.0, %v2016
      %v2018 = vpop.f32.mrb[0].mxu0
      %2019 = vmatprep.mubr.f32.mxu0 %v1920
      %2020 = vmatmul.mubr.f32.gmra.mrb[0].mxu0 %v1866
      %v2021 = vpop.f32.mrb[0].mxu0
      %v2022 = vadd.f32 0.0, %v2021
      %v2023 = vpop.f32.mrb[0].mxu0
      %2024 = vmatprep.mubr.f32.mxu0 %v1922
      %2025 = vmatmul.mubr.f32.gmra.mrb[0].mxu0 %v1870
      %v2026 = vpop.f32.mrb[0].mxu0
      %v2027 = vadd.f32 0.0, %v2026
      %v2028 = vpop.f32.mrb[0].mxu0
      %2029 = vmatprep.mubr.f32.mxu0 %v1924
      %2030 = vmatmul.mubr.f32.gmra.mrb[0].mxu0 %v1874
      %v2031 = vpop.f32.mrb[0].mxu0
      %v2032 = vadd.f32 0.0, %v2031
      %v2033 = vpop.f32.mrb[0].mxu0
      %2034 = vmatprep.mubr.f32.mxu0 %v1926
      %2035 = vmatmul.mubr.f32.gmra.mrb[0].mxu0 %v1878
      %v2036 = vpop.f32.mrb[0].mxu0
      %v2037 = vadd.f32 0.0, %v2036
      %v2038 = vpop.f32.mrb[0].mxu0
      %2039 = vmatprep.mubr.f32.mxu0 %v1928
      %2040 = vmatmul.mubr.f32.gmra.mrb[0].mxu0 %v1882
      %v2041 = vpop.f32.mrb[0].mxu0
      %v2042 = vadd.f32 0.0, %v2041
      %v2043 = vpop.f32.mrb[0].mxu0
      %2044 = vmatprep.mubr.f32.mxu0 %v1930
      %2045 = vmatmul.mubr.f32.gmra.mrb[0].mxu0 %v1886
      %v2046 = vpop.f32.mrb[0].mxu0
      %v2047 = vadd.f32 0.0, %v2046
      %v2048 = vpop.f32.mrb[0].mxu0
      %2049 = vmatprep.mubr.f32.mxu0 %v1932
      %2050 = vmatmul.mubr.f32.gmra.mrb[0].mxu0 %v1890
      %v2051 = vpop.f32.mrb[0].mxu0
      %v2052 = vadd.f32 0.0, %v2051
      %v2053 = vpop.f32.mrb[0].mxu0
      %2054 = vmatprep.mubr.f32.mxu0 %v1934
      %2055 = vmatmul.mubr.f32.gmra.mrb[0].mxu0 %v1894
      %v2056 = vpop.f32.mrb[0].mxu0
      %v2057 = vadd.f32 0.0, %v2056
      %v2058 = vpop.f32.mrb[0].mxu0
      %2059 = vmatprep.mubr.f32.mxu0 %v1936
      %2060 = vmatmul.mubr.f32.gmra.mrb[0].mxu0 %v1898
      %v2061 = vpop.f32.mrb[0].mxu0
      %v2062 = vadd.f32 0.0, %v2061
      %v2063 = vpop.f32.mrb[0].mxu0
      %2064 = vmatprep.mubr.f32.mxu0 %v1938
      %2065 = vmatmul.mubr.f32.gmra.mrb[0].mxu0 %v1897
      %v2066 = vpop.f32.mrb[0].mxu0
      %v2067 = vadd.f32 0.0, %v2066
      %v2068 = vpop.f32.mrb[0].mxu0
      %2069 = vdwg.mxu0
      %v2070 = vadd.f32 %v1761, %v2007
      %v2071 = vadd.f32 %v1766, %v2012
      %v2072 = vadd.f32 %v1771, %v2017
      %v2073 = vadd.f32 %v1776, %v2022
      %v2074 = vadd.f32 %v1781, %v2027
      %v2075 = vadd.f32 %v1786, %v2032
      %v2076 = vadd.f32 %v1791, %v2037
      %v2077 = vadd.f32 %v1796, %v2042
      %v2078 = vadd.f32 %v1801, %v2047
      %v2079 = vadd.f32 %v1806, %v2052
      %v2080 = vadd.f32 %v1811, %v2057
      %v2081 = vadd.f32 %v1816, %v2062
      %v2082 = vadd.f32 %v1821, %v2067
      %v2083 = vld [vmem:[%s5] sm:$0x1]
      %v2085 = vlaneseq
      %v2086 = vshrl.u32 %v2085, 7
      %v2087 = vsub.s32 0, %v2086
      %v2088 = vrot.slane %v2083, %v2087
      %v2090 = vadd.f32 %v2070, %v2088
      %v2091 = vadd.f32 %v2071, %v2088
      %v2092 = vadd.f32 %v2072, %v2088
      %v2093 = vadd.f32 %v2073, %v2088
      %v2094 = vadd.f32 %v2074, %v2088
      %v2095 = vadd.f32 %v2075, %v2088
      %v2096 = vadd.f32 %v2076, %v2088
      %v2097 = vadd.f32 %v2077, %v2088
      %v2098 = vadd.f32 %v2078, %v2088
      %v2099 = vadd.f32 %v2079, %v2088
      %v2100 = vadd.f32 %v2080, %v2088
      %v2101 = vadd.f32 %v2081, %v2088
      %v2102 = vadd.f32 %v2082, %v2088
      %v2103 = vld [vmem:[%s246 + $0x10] sm:$0xff]
      %v2104 = vld [vmem:[%s246 + $0x18] sm:$0xff]
      %v2105 = vld [vmem:[%s246 + $0x20] sm:$0xff]
      %v2106 = vld [vmem:[%s246 + $0x28] sm:$0xff]
      %v2107 = vld [vmem:[%s246 + $0x30] sm:$0xff]
      %v2108 = vld [vmem:[%s246 + $0x38] sm:$0xff]
      %v2109 = vld [vmem:[%s246 + $0x40] sm:$0xff]
      %v2110 = vld [vmem:[%s246 + $0x48] sm:$0xff]
      %v2111 = vld [vmem:[%s246 + $0x50] sm:$0xff]
      %v2112 = vld [vmem:[%s246 + $0x58] sm:$0xff]
      %v2113 = vld [vmem:[%s246 + $0x60] sm:$0xff]
      %v2114 = vld [vmem:[%s246 + $0x68] sm:$0xff]
      %v2115 = vld [vmem:[%s246 + $0x70] sm:$0xf]
      %v2116 = vadd.f32 %v2103, %v2090
      %v2117 = vadd.f32 %v2104, %v2091
      %v2118 = vadd.f32 %v2105, %v2092
      %v2119 = vadd.f32 %v2106, %v2093
      %v2120 = vadd.f32 %v2107, %v2094
      %v2121 = vadd.f32 %v2108, %v2095
      %v2122 = vadd.f32 %v2109, %v2096
      %v2123 = vadd.f32 %v2110, %v2097
      %v2124 = vadd.f32 %v2111, %v2098
      %v2125 = vadd.f32 %v2112, %v2099
      %v2126 = vadd.f32 %v2113, %v2100
      %v2127 = vadd.f32 %v2114, %v2101
      %v2128 = vadd.f32 %v2115, %v2102
      %2129 = vst.msk [vmem:[%s251] sm:$0xff] %vm357, %v2116
      %2130 = vst.msk [vmem:[%s251 + $0x8] sm:$0xff] %vm357, %v2117
      %2131 = vst.msk [vmem:[%s251 + $0x10] sm:$0xff] %vm357, %v2118
      %2132 = vst.msk [vmem:[%s251 + $0x18] sm:$0xff] %vm357, %v2119
      %2133 = vst.msk [vmem:[%s251 + $0x20] sm:$0xff] %vm357, %v2120
      %2134 = vst.msk [vmem:[%s251 + $0x28] sm:$0xff] %vm357, %v2121
      %2135 = vst.msk [vmem:[%s251 + $0x30] sm:$0xff] %vm357, %v2122
      %2136 = vst.msk [vmem:[%s251 + $0x38] sm:$0xff] %vm357, %v2123
      %2137 = vst.msk [vmem:[%s251 + $0x40] sm:$0xff] %vm357, %v2124
      %2138 = vst.msk [vmem:[%s251 + $0x48] sm:$0xff] %vm357, %v2125
      %2139 = vst.msk [vmem:[%s251 + $0x50] sm:$0xff] %vm357, %v2126
      %2140 = vst.msk [vmem:[%s251 + $0x58] sm:$0xff] %vm357, %v2127
      %2141 = vst.msk [vmem:[%s251 + $0x60] sm:$0xf] %vm1251, %v2128
      %p2142 = scmp.lt.s32.totalorder %s17, 1
      %s2143 = scalar_select %p2142, %s17, 1
      %s2144 = smul.addr %s2143, 13
      %s2145 = smul.addr %s2144, 8
      %s2146 = scalar_lea.vmem %s6, %s2145
      // Predicated region
      $region45: #{residual_block_nobn.1} parent=43 // pred_check
        %p2147 = pneg %p166
      $region46: #{residual_block_nobn.1} parent=43 // pred_check_branch
        %2149 = sbr.rel (%p2147) target = $region48
      $region47: #{residual_block_nobn.1} parent=43 // pred_region
        _
      $region48: #{residual_block_nobn.1} parent=43 // pred_fallthru
        _
    $region44: #{residual_block_nobn.1} parent=5 // pred_fallthru
      _
    %p2150 = scmp.le.s32.totalorder 2, %s12
    // Predicated region
    $region49: #{residual_block_nobn.1} parent=5 // pred_check
      %p2151 = pneg %p2150
    $region50: #{residual_block_nobn.1} parent=5 // pred_check_branch
      %2153 = sbr.rel (%p2151) target = $region52
    $region51: #{residual_block_nobn.1} parent=5 // pred_region
      %s2154 = ssub.s32 %s12, 2
      // Predicated region
      $region53: #{residual_block_nobn.1} parent=51 // pred_check
        %p2155 = pneg %p172
      $region54: #{residual_block_nobn.1} parent=51 // pred_check_branch
        %2157 = sbr.rel (%p2155) target = $region56
      $region55: #{residual_block_nobn.1} parent=51 // pred_region
        %p2158 = scmp.lt.s32.totalorder %s18, 1
        %s2159 = scalar_select %p2158, %s18, 1
        %s2160 = smul.addr %s2159, 13
        %s2161 = smul.addr %s2160, 8
        %s2162 = scalar_lea.vmem %s6, %s2161
      $region56: #{residual_block_nobn.1} parent=51 // pred_fallthru
        _
    $region52: #{residual_block_nobn.1} parent=5 // pred_fallthru
      _
  $region6: #{residual_block_nobn.1} parent=0 // loop_footer
    %s16 = sadd.s32 1, %s12
  $region7: #{residual_block_nobn.1} parent=0 // loop_footer_branch
    %11 = sbr.rel target = $region3
  $region8: #{residual_block_nobn.1} parent=0 // loop_exit
    _

</llo_original>
